<compile_context>
chip_gen: v5e
topology: v5e:2x2
jax: 0.10.0
libtpu: 0.0.40
codegen_flags: <defaults>
</compile_context>

<pallas_src>
import math

import numpy as np
import jax
import jax.numpy as jnp
from jax.experimental import pallas as pl
from jax.experimental.pallas import tpu as pltpu

# ----------------------------- config ---------------------------------------
BATCH = 2
CHANNELS = 3
IMG = 32
PATCH = 16
HIDDEN = 32
HEADS = 4
HEAD_DIM = HIDDEN // HEADS
MLP = 4 * HIDDEN
LAYERS = 2
LN_EPS = 1e-12  # HF ViT layer_norm_eps default

NUM_PATCHES = (IMG // PATCH) ** 2    # 4
SEQ = NUM_PATCHES + 1                # 5  ([CLS] + patches)
SEQ_PAD = 8                          # pad tokens to a sublane multiple
ROWS = BATCH * SEQ_PAD               # 16
CPP = CHANNELS * PATCH * PATCH       # 768
NEG = -1e30


# ----------------------------- fused kernel ----------------------------------
def _vit_fused_kernel(
    patches_ref, pw_ref, base_ref, mask_ref,
    wqkv_ref, bqkv_ref, wo_ref, bo_ref,
    ln1g_ref, ln1b_ref, ln2g_ref, ln2b_ref,
    w1_ref, b1_ref, w2_ref, b2_ref,
    lnfg_ref, lnfb_ref,
    out_ref,
    hs_ref, qkv_ref, ctx_ref,
):
    layer = pl.program_id(0)

    # Layer 0 prologue: patch-embedding projection. `base` already contains
    # cls+pos (row 0), pos+folded-bias (patch rows), zeros (pad rows); padded
    # patch rows in `patches` are zero so they pick up no projection.
    @pl.when(layer == 0)
    def _():
        hs_ref[...] = base_ref[...] + jnp.dot(
            patches_ref[...], pw_ref[...], preferred_element_type=jnp.float32
        )

    def ln(x, g, b):
        mean = jnp.mean(x, axis=-1, keepdims=True)
        var = jnp.mean(jnp.square(x - mean), axis=-1, keepdims=True)
        return (x - mean) * jax.lax.rsqrt(var + LN_EPS) * g + b

    x = hs_ref[...]          # (ROWS, HIDDEN) carried hidden state
    mask = mask_ref[...]     # (ROWS, ROWS) additive attention mask

    # ---- self-attention block (pre-LN); 1/sqrt(head_dim) folded into wq/bq ----
    x1 = ln(x, ln1g_ref[0], ln1b_ref[0])
    qkv_ref[...] = (
        jnp.dot(x1, wqkv_ref[0], preferred_element_type=jnp.float32) + bqkv_ref[0]
    )
    for h in range(HEADS):  # unrolled at trace time; all data stays in VMEM/vregs
        q = qkv_ref[:, h * HEAD_DIM:(h + 1) * HEAD_DIM]
        k = qkv_ref[:, HIDDEN + h * HEAD_DIM:HIDDEN + (h + 1) * HEAD_DIM]
        v = qkv_ref[:, 2 * HIDDEN + h * HEAD_DIM:2 * HIDDEN + (h + 1) * HEAD_DIM]
        # contract on the head dim directly (no explicit transpose).
        s = jax.lax.dot_general(
            q, k, (((1,), (1,)), ((), ())), preferred_element_type=jnp.float32
        ) + mask
        s = s - jnp.max(s, axis=-1, keepdims=True)
        p = jnp.exp(s)
        p = p * pl.reciprocal(jnp.sum(p, axis=-1, keepdims=True), approx=True)
        ctx_ref[:, h * HEAD_DIM:(h + 1) * HEAD_DIM] = jnp.dot(
            p, v, preferred_element_type=jnp.float32
        )
    attn = (
        jnp.dot(ctx_ref[...], wo_ref[0], preferred_element_type=jnp.float32)
        + bo_ref[0]
    )
    hs1 = x + attn

    # ---- MLP block (pre-LN) ----
    x2 = ln(hs1, ln2g_ref[0], ln2b_ref[0])
    h1 = jnp.dot(x2, w1_ref[0], preferred_element_type=jnp.float32) + b1_ref[0]
    # TODO(synk): HF ViT uses exact erf-GELU; tanh-approximate GELU used here.
    h1 = jax.nn.gelu(h1, approximate=True)
    hs2 = hs1 + jnp.dot(h1, w2_ref[0], preferred_element_type=jnp.float32) + b2_ref[0]
    hs_ref[...] = hs2

    # Last layer: final LayerNorm of ViTModel -> last_hidden_state.
    @pl.when(layer == LAYERS - 1)
    def _():
        out_ref[...] = ln(hs2, lnfg_ref[...], lnfb_ref[...])


# ----------------------------- parameters -----------------------------------
def init_params(key):
    def nrm(k, shape, scale=0.02):
        return scale * jax.random.normal(k, shape, dtype=jnp.float32)

    keys = iter(jax.random.split(key, 8 + LAYERS * 16))
    p = {
        # Conv2d(C, D, kernel=P, stride=P) flattened to a matmul: (C*P*P, D)
        "patch_w": nrm(next(keys), (CPP, HIDDEN)),
        "patch_b": nrm(next(keys), (HIDDEN,)),
        "cls": nrm(next(keys), (1, 1, HIDDEN)),
        "pos": nrm(next(keys), (1, SEQ, HIDDEN)),
        "lnf_g": jnp.ones((HIDDEN,), jnp.float32),
        "lnf_b": jnp.zeros((HIDDEN,), jnp.float32),
        "layers": [],
    }
    for _ in range(LAYERS):
        lyr = {
            "ln1_g": jnp.ones((HIDDEN,), jnp.float32),
            "ln1_b": jnp.zeros((HIDDEN,), jnp.float32),
            "wq": nrm(next(keys), (HIDDEN, HIDDEN)),
            "bq": nrm(next(keys), (HIDDEN,)),
            "wk": nrm(next(keys), (HIDDEN, HIDDEN)),
            "bk": nrm(next(keys), (HIDDEN,)),
            "wv": nrm(next(keys), (HIDDEN, HIDDEN)),
            "bv": nrm(next(keys), (HIDDEN,)),
            "wo": nrm(next(keys), (HIDDEN, HIDDEN)),
            "bo": nrm(next(keys), (HIDDEN,)),
            "ln2_g": jnp.ones((HIDDEN,), jnp.float32),
            "ln2_b": jnp.zeros((HIDDEN,), jnp.float32),
            "w1": nrm(next(keys), (HIDDEN, MLP)),
            "b1": nrm(next(keys), (MLP,)),
            "w2": nrm(next(keys), (MLP, HIDDEN)),
            "b2": nrm(next(keys), (HIDDEN,)),
        }
        p["layers"].append(lyr)
    return p


# ----------------------------- forward --------------------------------------
def _const_spec(shape):
    return pl.BlockSpec(shape, lambda l: (0, 0))


def _layer_spec(shape):
    return pl.BlockSpec((1,) + shape, lambda l: (l, 0, 0))


def vit_encoder_forward(images, params):
    """images: (B, C, H, W) float32 in [0,1]. Returns last_hidden_state (B, SEQ, D)."""
    b, c, hh, ww = images.shape
    nh, nw = hh // PATCH, ww // PATCH
    rows = b * SEQ_PAD

    # --- plain-JAX glue: strided patch extraction into a token-aligned padded slab ---
    patches = (
        images.reshape(b, c, nh, PATCH, nw, PATCH)
        .transpose(0, 2, 4, 1, 3, 5)
        .reshape(b, nh * nw, c * PATCH * PATCH)
    )
    # per batch rows: [CLS slot (zeros), patches, pad zeros] -> SEQ_PAD rows
    patches_pad = jnp.pad(
        patches, ((0, 0), (1, SEQ_PAD - 1 - nh * nw), (0, 0))
    ).reshape(rows, c * PATCH * PATCH)

    # --- fold constants into weights (feature-extractor norm, cls/pos, QK scale) ---
    # (x - 0.5) / 0.5 = 2x - 1  ->  fold into the patch projection.
    pw_eff = 2.0 * params["patch_w"]                                 # (CPP, HIDDEN)
    pb_eff = params["patch_b"] - jnp.sum(params["patch_w"], axis=0)  # (HIDDEN,)
    pos = params["pos"][0]       # (SEQ, HIDDEN)
    cls = params["cls"][0, 0]    # (HIDDEN,)
    base = jnp.zeros((SEQ_PAD, HIDDEN), jnp.float32)
    base = base.at[0].set(cls + pos[0])
    base = base.at[1:SEQ].set(pos[1:] + pb_eff)
    base = jnp.tile(base, (b, 1))                                    # (rows, HIDDEN)

    scale = 1.0 / math.sqrt(HEAD_DIM)
    layers = params["layers"]
    wqkv = jnp.stack(
        [jnp.concatenate([l["wq"] * scale, l["wk"], l["wv"]], axis=1) for l in layers]
    )                                                                 # (L, H, 3H)
    bqkv = jnp.stack(
        [jnp.concatenate([l["bq"] * scale, l["bk"], l["bv"]])[None, :] for l in layers]
    )                                                                 # (L, 1, 3H)
    wo = jnp.stack([l["wo"] for l in layers])
    bo = jnp.stack([l["bo"][None, :] for l in layers])
    ln1g = jnp.stack([l["ln1_g"][None, :] for l in layers])
    ln1b = jnp.stack([l["ln1_b"][None, :] for l in layers])
    ln2g = jnp.stack([l["ln2_g"][None, :] for l in layers])
    ln2b = jnp.stack([l["ln2_b"][None, :] for l in layers])
    w1 = jnp.stack([l["w1"] for l in layers])
    b1 = jnp.stack([l["b1"][None, :] for l in layers])
    w2 = jnp.stack([l["w2"] for l in layers])
    b2 = jnp.stack([l["b2"][None, :] for l in layers])
    lnfg = params["lnf_g"][None, :]
    lnfb = params["lnf_b"][None, :]

    # additive attention mask (compile-time constant): block-diagonal per batch,
    # padded key tokens disabled.
    ri = np.arange(rows)[:, None]
    ci = np.arange(rows)[None, :]
    valid = (ri // SEQ_PAD == ci // SEQ_PAD) & ((ci % SEQ_PAD) < SEQ)
    attn_mask = jnp.asarray(np.where(valid, 0.0, NEG), dtype=jnp.float32)

    grid_spec = pltpu.PrefetchScalarGridSpec(
        num_scalar_prefetch=0,
        grid=(LAYERS,),
        in_specs=[
            _const_spec((rows, c * PATCH * PATCH)),    # patches_pad
            _const_spec((c * PATCH * PATCH, HIDDEN)),  # pw_eff
            _const_spec((rows, HIDDEN)),               # base
            _const_spec((rows, rows)),                 # attn_mask
            _layer_spec((HIDDEN, 3 * HIDDEN)),         # wqkv
            _layer_spec((1, 3 * HIDDEN)),              # bqkv
            _layer_spec((HIDDEN, HIDDEN)),             # wo
            _layer_spec((1, HIDDEN)),                  # bo
            _layer_spec((1, HIDDEN)),                  # ln1_g
            _layer_spec((1, HIDDEN)),                  # ln1_b
            _layer_spec((1, HIDDEN)),                  # ln2_g
            _layer_spec((1, HIDDEN)),                  # ln2_b
            _layer_spec((HIDDEN, MLP)),                # w1
            _layer_spec((1, MLP)),                     # b1
            _layer_spec((MLP, HIDDEN)),                # w2
            _layer_spec((1, HIDDEN)),                  # b2
            _const_spec((1, HIDDEN)),                  # lnf_g
            _const_spec((1, HIDDEN)),                  # lnf_b
        ],
        out_specs=_const_spec((rows, HIDDEN)),
        scratch_shapes=[
            pltpu.VMEM((rows, HIDDEN), jnp.float32),       # hs carry
            pltpu.VMEM((rows, 3 * HIDDEN), jnp.float32),   # fused qkv
            pltpu.VMEM((rows, HIDDEN), jnp.float32),       # attention context
        ],
    )

    out = pl.pallas_call(
        _vit_fused_kernel,
        out_shape=jax.ShapeDtypeStruct((rows, HIDDEN), jnp.float32),
        grid_spec=grid_spec,
        compiler_params=pltpu.CompilerParams(
            # layer axis carries state in VMEM scratch -> sequential.
            dimension_semantics=("arbitrary",),
        ),
    )(
        patches_pad, pw_eff, base, attn_mask,
        wqkv, bqkv, wo, bo,
        ln1g, ln1b, ln2g, ln2b,
        w1, b1, w2, b2,
        lnfg, lnfb,
    )

    # drop pad tokens -> (B, SEQ, HIDDEN)
    return out.reshape(b, SEQ_PAD, HIDDEN)[:, :SEQ, :]


# ----------------------------- main ------------------------------------------
if __name__ == "__main__":
    key = jax.random.PRNGKey(0)
    k_img, k_par = jax.random.split(key)
    images = jax.random.uniform(
        k_img, (BATCH, CHANNELS, IMG, IMG), dtype=jnp.float32
    )
    params = init_params(k_par)

    img_feat = jax.jit(vit_encoder_forward)(images, params)
    jax.block_until_ready(img_feat)

    assert img_feat.shape == (BATCH, SEQ, HIDDEN)
    assert img_feat.dtype == jnp.float32
    assert bool(jnp.all(jnp.isfinite(img_feat)))
    print("KERNEL_OK")
</pallas_src>

<mosaic_0001>
module attributes {stable_mosaic.version = 11 : i64} {
  func.func @_vit_fused_kernel(%arg0: i32, %arg1: memref<16x768xf32, #tpu.memory_space<vmem>>, %arg2: memref<768x32xf32, #tpu.memory_space<vmem>>, %arg3: memref<16x32xf32, #tpu.memory_space<vmem>>, %arg4: memref<16x16xf32, #tpu.memory_space<vmem>>, %arg5: memref<1x32x96xf32, #tpu.memory_space<vmem>>, %arg6: memref<1x1x96xf32, #tpu.memory_space<vmem>>, %arg7: memref<1x32x32xf32, #tpu.memory_space<vmem>>, %arg8: memref<1x1x32xf32, #tpu.memory_space<vmem>>, %arg9: memref<1x1x32xf32, #tpu.memory_space<vmem>>, %arg10: memref<1x1x32xf32, #tpu.memory_space<vmem>>, %arg11: memref<1x1x32xf32, #tpu.memory_space<vmem>>, %arg12: memref<1x1x32xf32, #tpu.memory_space<vmem>>, %arg13: memref<1x32x128xf32, #tpu.memory_space<vmem>>, %arg14: memref<1x1x128xf32, #tpu.memory_space<vmem>>, %arg15: memref<1x128x32xf32, #tpu.memory_space<vmem>>, %arg16: memref<1x1x32xf32, #tpu.memory_space<vmem>>, %arg17: memref<1x32xf32, #tpu.memory_space<vmem>>, %arg18: memref<1x32xf32, #tpu.memory_space<vmem>>, %arg19: memref<16x32xf32, #tpu.memory_space<vmem>>, %arg20: memref<16x32xf32, #tpu.memory_space<vmem>>, %arg21: memref<16x96xf32, #tpu.memory_space<vmem>>, %arg22: memref<16x32xf32, #tpu.memory_space<vmem>>) attributes {dimension_semantics = [#tpu.dimension_semantics<arbitrary>], iteration_bounds = array<i64: 2>, scalar_prefetch = 0 : i64, scratch_operands = 3 : i64, tpu.core_type = #tpu.core_type<tc>, window_params = [{pipeline_mode = #tpu.pipeline_mode<synchronous>, transform_indices = @transform_0, window_bounds = array<i64: 16, 768>}, {pipeline_mode = #tpu.pipeline_mode<synchronous>, transform_indices = @transform_1, window_bounds = array<i64: 768, 32>}, {pipeline_mode = #tpu.pipeline_mode<synchronous>, transform_indices = @transform_2, window_bounds = array<i64: 16, 32>}, {pipeline_mode = #tpu.pipeline_mode<synchronous>, transform_indices = @transform_3, window_bounds = array<i64: 16, 16>}, {transform_indices = @transform_4, window_bounds = array<i64: 1, 32, 96>}, {transform_indices = @transform_5, window_bounds = array<i64: 1, 1, 96>}, {transform_indices = @transform_6, window_bounds = array<i64: 1, 32, 32>}, {transform_indices = @transform_7, window_bounds = array<i64: 1, 1, 32>}, {transform_indices = @transform_8, window_bounds = array<i64: 1, 1, 32>}, {transform_indices = @transform_9, window_bounds = array<i64: 1, 1, 32>}, {transform_indices = @transform_10, window_bounds = array<i64: 1, 1, 32>}, {transform_indices = @transform_11, window_bounds = array<i64: 1, 1, 32>}, {transform_indices = @transform_12, window_bounds = array<i64: 1, 32, 128>}, {transform_indices = @transform_13, window_bounds = array<i64: 1, 1, 128>}, {transform_indices = @transform_14, window_bounds = array<i64: 1, 128, 32>}, {transform_indices = @transform_15, window_bounds = array<i64: 1, 1, 32>}, {pipeline_mode = #tpu.pipeline_mode<synchronous>, transform_indices = @transform_16, window_bounds = array<i64: 1, 32>}, {pipeline_mode = #tpu.pipeline_mode<synchronous>, transform_indices = @transform_17, window_bounds = array<i64: 1, 32>}, {pipeline_mode = #tpu.pipeline_mode<synchronous>, transform_indices = @transform_18, window_bounds = array<i64: 16, 32>}]} {
    %c0_i32 = arith.constant 0 : i32
    %0 = arith.cmpi eq, %arg0, %c0_i32 : i32
    %1 = arith.extui %0 : i1 to i32
    %c0_i32_0 = arith.constant 0 : i32
    %2 = arith.cmpi ne, %1, %c0_i32_0 : i32
    scf.if %2 {
      %c0_101 = arith.constant 0 : index
      %c0_102 = arith.constant 0 : index
      %174 = vector.load %arg3[%c0_101, %c0_102] : memref<16x32xf32, #tpu.memory_space<vmem>>, vector<16x32xf32>
      %c0_103 = arith.constant 0 : index
      %c0_104 = arith.constant 0 : index
      %175 = vector.load %arg1[%c0_103, %c0_104] : memref<16x768xf32, #tpu.memory_space<vmem>>, vector<16x768xf32>
      %c0_105 = arith.constant 0 : index
      %c0_106 = arith.constant 0 : index
      %176 = vector.load %arg2[%c0_105, %c0_106] : memref<768x32xf32, #tpu.memory_space<vmem>>, vector<768x32xf32>
      %cst_107 = arith.constant dense<0.000000e+00> : vector<16x32xf32>
      %177 = tpu.matmul %175, %176, %cst_107 {dimension_numbers = #tpu.dot_dimension_numbers<[1], [0], [0], [1], [0, 0, 1, 1], [], []>} : vector<16x768xf32>, vector<768x32xf32>, vector<16x32xf32> -> vector<16x32xf32>
      %178 = arith.addf %174, %177 : vector<16x32xf32>
      %c0_108 = arith.constant 0 : index
      %c0_109 = arith.constant 0 : index
      %179 = vector.load %arg20[%c0_108, %c0_109] : memref<16x32xf32, #tpu.memory_space<vmem>>, vector<16x32xf32>
      tpu.vector_store %arg20[%c0_108, %c0_109], %178 {strides = array<i32>} : memref<16x32xf32, #tpu.memory_space<vmem>>, vector<16x32xf32>,
    } else {
    }
    %c0 = arith.constant 0 : index
    %c0_1 = arith.constant 0 : index
    %3 = vector.load %arg20[%c0, %c0_1] : memref<16x32xf32, #tpu.memory_space<vmem>>, vector<16x32xf32>
    %c0_2 = arith.constant 0 : index
    %c0_3 = arith.constant 0 : index
    %4 = vector.load %arg4[%c0_2, %c0_3] : memref<16x16xf32, #tpu.memory_space<vmem>>, vector<16x16xf32>
    %c0_4 = arith.constant 0 : index
    %c0_5 = arith.constant 0 : index
    %c0_6 = arith.constant 0 : index
    %5 = vector.load %arg9[%c0_4, %c0_5, %c0_6] : memref<1x1x32xf32, #tpu.memory_space<vmem>>, vector<1x1x32xf32>
    %6 = vector.shape_cast %5 : vector<1x1x32xf32> to vector<1x32xf32>
    %c0_7 = arith.constant 0 : index
    %c0_8 = arith.constant 0 : index
    %c0_9 = arith.constant 0 : index
    %7 = vector.load %arg10[%c0_7, %c0_8, %c0_9] : memref<1x1x32xf32, #tpu.memory_space<vmem>>, vector<1x1x32xf32>
    %8 = vector.shape_cast %7 : vector<1x1x32xf32> to vector<1x32xf32>
    %cst = arith.constant dense<0.000000e+00> : vector<16xf32>
    %9 = vector.multi_reduction <add>, %3, %cst [1] : vector<16x32xf32> to vector<16xf32>
    %10 = vector.shape_cast %9 : vector<16xf32> to vector<16x1xf32>
    %cst_10 = arith.constant 3.200000e+01 : f32
    %11 = vector.broadcast %cst_10 : f32 to vector<16x1xf32>
    %12 = arith.divf %10, %11 : vector<16x1xf32>
    %13 = vector.broadcast %12 : vector<16x1xf32> to vector<16x32xf32>
    %14 = arith.subf %3, %13 : vector<16x32xf32>
    %15 = arith.mulf %14, %14 : vector<16x32xf32>
    %cst_11 = arith.constant dense<0.000000e+00> : vector<16xf32>
    %16 = vector.multi_reduction <add>, %15, %cst_11 [1] : vector<16x32xf32> to vector<16xf32>
    %17 = vector.shape_cast %16 : vector<16xf32> to vector<16x1xf32>
    %cst_12 = arith.constant 3.200000e+01 : f32
    %18 = vector.broadcast %cst_12 : f32 to vector<16x1xf32>
    %19 = arith.divf %17, %18 : vector<16x1xf32>
    %20 = vector.broadcast %12 : vector<16x1xf32> to vector<16x32xf32>
    %21 = arith.subf %3, %20 : vector<16x32xf32>
    %cst_13 = arith.constant 9.99999996E-13 : f32
    %22 = vector.broadcast %cst_13 : f32 to vector<16x1xf32>
    %23 = arith.addf %19, %22 : vector<16x1xf32>
    %24 = math.rsqrt %23 : vector<16x1xf32>
    %25 = vector.broadcast %24 : vector<16x1xf32> to vector<16x32xf32>
    %26 = arith.mulf %21, %25 : vector<16x32xf32>
    %27 = vector.broadcast %6 : vector<1x32xf32> to vector<16x32xf32>
    %28 = arith.mulf %26, %27 : vector<16x32xf32>
    %29 = vector.broadcast %8 : vector<1x32xf32> to vector<16x32xf32>
    %30 = arith.addf %28, %29 : vector<16x32xf32>
    %c0_14 = arith.constant 0 : index
    %c0_15 = arith.constant 0 : index
    %c0_16 = arith.constant 0 : index
    %31 = vector.load %arg5[%c0_14, %c0_15, %c0_16] : memref<1x32x96xf32, #tpu.memory_space<vmem>>, vector<1x32x96xf32>
    %32 = vector.shape_cast %31 : vector<1x32x96xf32> to vector<32x96xf32>
    %cst_17 = arith.constant dense<0.000000e+00> : vector<16x96xf32>
    %33 = tpu.matmul %30, %32, %cst_17 {dimension_numbers = #tpu.dot_dimension_numbers<[1], [0], [0], [1], [0, 0, 1, 1], [], []>} : vector<16x32xf32>, vector<32x96xf32>, vector<16x96xf32> -> vector<16x96xf32>
    %c0_18 = arith.constant 0 : index
    %c0_19 = arith.constant 0 : index
    %c0_20 = arith.constant 0 : index
    %34 = vector.load %arg6[%c0_18, %c0_19, %c0_20] : memref<1x1x96xf32, #tpu.memory_space<vmem>>, vector<1x1x96xf32>
    %35 = vector.shape_cast %34 : vector<1x1x96xf32> to vector<1x96xf32>
    %36 = vector.broadcast %35 : vector<1x96xf32> to vector<16x96xf32>
    %37 = arith.addf %33, %36 : vector<16x96xf32>
    %c0_21 = arith.constant 0 : index
    %c0_22 = arith.constant 0 : index
    %38 = vector.load %arg21[%c0_21, %c0_22] : memref<16x96xf32, #tpu.memory_space<vmem>>, vector<16x96xf32>
    tpu.vector_store %arg21[%c0_21, %c0_22], %37 {strides = array<i32>} : memref<16x96xf32, #tpu.memory_space<vmem>>, vector<16x96xf32>,
    %c0_23 = arith.constant 0 : index
    %c0_24 = arith.constant 0 : index
    %39 = vector.load %arg21[%c0_23, %c0_24] : memref<16x96xf32, #tpu.memory_space<vmem>>, vector<16x8xf32>
    %c0_25 = arith.constant 0 : index
    %c32 = arith.constant 32 : index
    %40 = vector.load %arg21[%c0_25, %c32] : memref<16x96xf32, #tpu.memory_space<vmem>>, vector<16x8xf32>
    %c0_26 = arith.constant 0 : index
    %c64 = arith.constant 64 : index
    %41 = vector.load %arg21[%c0_26, %c64] : memref<16x96xf32, #tpu.memory_space<vmem>>, vector<16x8xf32>
    %cst_27 = arith.constant dense<0.000000e+00> : vector<16x16xf32>
    %42 = tpu.matmul %39, %40, %cst_27 {dimension_numbers = #tpu.dot_dimension_numbers<[1], [1], [0], [0], [0, 0, 1, 0], [], []>} : vector<16x8xf32>, vector<16x8xf32>, vector<16x16xf32> -> vector<16x16xf32>
    %43 = arith.addf %42, %4 : vector<16x16xf32>
    %cst_28 = arith.constant dense<0xFF800000> : vector<16xf32>
    %44 = vector.multi_reduction <maximumf>, %43, %cst_28 [1] : vector<16x16xf32> to vector<16xf32>
    %45 = vector.shape_cast %44 : vector<16xf32> to vector<16x1xf32>
    %46 = vector.broadcast %45 : vector<16x1xf32> to vector<16x16xf32>
    %47 = arith.subf %43, %46 : vector<16x16xf32>
    %48 = math.exp %47 : vector<16x16xf32>
    %cst_29 = arith.constant dense<0.000000e+00> : vector<16xf32>
    %49 = vector.multi_reduction <add>, %48, %cst_29 [1] : vector<16x16xf32> to vector<16xf32>
    %50 = vector.shape_cast %49 : vector<16xf32> to vector<16x1xf32>
    %51 = tpu.reciprocal %50 {approx = true} : vector<16x1xf32> -> vector<16x1xf32>
    %52 = vector.broadcast %51 : vector<16x1xf32> to vector<16x16xf32>
    %53 = arith.mulf %48, %52 : vector<16x16xf32>
    %cst_30 = arith.constant dense<0.000000e+00> : vector<16x8xf32>
    %54 = tpu.matmul %53, %41, %cst_30 {dimension_numbers = #tpu.dot_dimension_numbers<[1], [0], [0], [1], [0, 0, 1, 1], [], []>} : vector<16x16xf32>, vector<16x8xf32>, vector<16x8xf32> -> vector<16x8xf32>
    %c0_31 = arith.constant 0 : index
    %c0_32 = arith.constant 0 : index
    %55 = vector.load %arg22[%c0_31, %c0_32] : memref<16x32xf32, #tpu.memory_space<vmem>>, vector<16x8xf32>
    tpu.vector_store %arg22[%c0_31, %c0_32], %54 {strides = array<i32>} : memref<16x32xf32, #tpu.memory_space<vmem>>, vector<16x8xf32>,
    %c0_33 = arith.constant 0 : index
    %c8 = arith.constant 8 : index
    %56 = vector.load %arg21[%c0_33, %c8] : memref<16x96xf32, #tpu.memory_space<vmem>>, vector<16x8xf32>
    %c0_34 = arith.constant 0 : index
    %c40 = arith.constant 40 : index
    %57 = vector.load %arg21[%c0_34, %c40] : memref<16x96xf32, #tpu.memory_space<vmem>>, vector<16x8xf32>
    %c0_35 = arith.constant 0 : index
    %c72 = arith.constant 72 : index
    %58 = vector.load %arg21[%c0_35, %c72] : memref<16x96xf32, #tpu.memory_space<vmem>>, vector<16x8xf32>
    %cst_36 = arith.constant dense<0.000000e+00> : vector<16x16xf32>
    %59 = tpu.matmul %56, %57, %cst_36 {dimension_numbers = #tpu.dot_dimension_numbers<[1], [1], [0], [0], [0, 0, 1, 0], [], []>} : vector<16x8xf32>, vector<16x8xf32>, vector<16x16xf32> -> vector<16x16xf32>
    %60 = arith.addf %59, %4 : vector<16x16xf32>
    %cst_37 = arith.constant dense<0xFF800000> : vector<16xf32>
    %61 = vector.multi_reduction <maximumf>, %60, %cst_37 [1] : vector<16x16xf32> to vector<16xf32>
    %62 = vector.shape_cast %61 : vector<16xf32> to vector<16x1xf32>
    %63 = vector.broadcast %62 : vector<16x1xf32> to vector<16x16xf32>
    %64 = arith.subf %60, %63 : vector<16x16xf32>
    %65 = math.exp %64 : vector<16x16xf32>
    %cst_38 = arith.constant dense<0.000000e+00> : vector<16xf32>
    %66 = vector.multi_reduction <add>, %65, %cst_38 [1] : vector<16x16xf32> to vector<16xf32>
    %67 = vector.shape_cast %66 : vector<16xf32> to vector<16x1xf32>
    %68 = tpu.reciprocal %67 {approx = true} : vector<16x1xf32> -> vector<16x1xf32>
    %69 = vector.broadcast %68 : vector<16x1xf32> to vector<16x16xf32>
    %70 = arith.mulf %65, %69 : vector<16x16xf32>
    %cst_39 = arith.constant dense<0.000000e+00> : vector<16x8xf32>
    %71 = tpu.matmul %70, %58, %cst_39 {dimension_numbers = #tpu.dot_dimension_numbers<[1], [0], [0], [1], [0, 0, 1, 1], [], []>} : vector<16x16xf32>, vector<16x8xf32>, vector<16x8xf32> -> vector<16x8xf32>
    %c0_40 = arith.constant 0 : index
    %c8_41 = arith.constant 8 : index
    %72 = vector.load %arg22[%c0_40, %c8_41] : memref<16x32xf32, #tpu.memory_space<vmem>>, vector<16x8xf32>
    tpu.vector_store %arg22[%c0_40, %c8_41], %71 {strides = array<i32>} : memref<16x32xf32, #tpu.memory_space<vmem>>, vector<16x8xf32>,
    %c0_42 = arith.constant 0 : index
    %c16 = arith.constant 16 : index
    %73 = vector.load %arg21[%c0_42, %c16] : memref<16x96xf32, #tpu.memory_space<vmem>>, vector<16x8xf32>
    %c0_43 = arith.constant 0 : index
    %c48 = arith.constant 48 : index
    %74 = vector.load %arg21[%c0_43, %c48] : memref<16x96xf32, #tpu.memory_space<vmem>>, vector<16x8xf32>
    %c0_44 = arith.constant 0 : index
    %c80 = arith.constant 80 : index
    %75 = vector.load %arg21[%c0_44, %c80] : memref<16x96xf32, #tpu.memory_space<vmem>>, vector<16x8xf32>
    %cst_45 = arith.constant dense<0.000000e+00> : vector<16x16xf32>
    %76 = tpu.matmul %73, %74, %cst_45 {dimension_numbers = #tpu.dot_dimension_numbers<[1], [1], [0], [0], [0, 0, 1, 0], [], []>} : vector<16x8xf32>, vector<16x8xf32>, vector<16x16xf32> -> vector<16x16xf32>
    %77 = arith.addf %76, %4 : vector<16x16xf32>
    %cst_46 = arith.constant dense<0xFF800000> : vector<16xf32>
    %78 = vector.multi_reduction <maximumf>, %77, %cst_46 [1] : vector<16x16xf32> to vector<16xf32>
    %79 = vector.shape_cast %78 : vector<16xf32> to vector<16x1xf32>
    %80 = vector.broadcast %79 : vector<16x1xf32> to vector<16x16xf32>
    %81 = arith.subf %77, %80 : vector<16x16xf32>
    %82 = math.exp %81 : vector<16x16xf32>
    %cst_47 = arith.constant dense<0.000000e+00> : vector<16xf32>
    %83 = vector.multi_reduction <add>, %82, %cst_47 [1] : vector<16x16xf32> to vector<16xf32>
    %84 = vector.shape_cast %83 : vector<16xf32> to vector<16x1xf32>
    %85 = tpu.reciprocal %84 {approx = true} : vector<16x1xf32> -> vector<16x1xf32>
    %86 = vector.broadcast %85 : vector<16x1xf32> to vector<16x16xf32>
    %87 = arith.mulf %82, %86 : vector<16x16xf32>
    %cst_48 = arith.constant dense<0.000000e+00> : vector<16x8xf32>
    %88 = tpu.matmul %87, %75, %cst_48 {dimension_numbers = #tpu.dot_dimension_numbers<[1], [0], [0], [1], [0, 0, 1, 1], [], []>} : vector<16x16xf32>, vector<16x8xf32>, vector<16x8xf32> -> vector<16x8xf32>
    %c0_49 = arith.constant 0 : index
    %c16_50 = arith.constant 16 : index
    %89 = vector.load %arg22[%c0_49, %c16_50] : memref<16x32xf32, #tpu.memory_space<vmem>>, vector<16x8xf32>
    tpu.vector_store %arg22[%c0_49, %c16_50], %88 {strides = array<i32>} : memref<16x32xf32, #tpu.memory_space<vmem>>, vector<16x8xf32>,
    %c0_51 = arith.constant 0 : index
    %c24 = arith.constant 24 : index
    %90 = vector.load %arg21[%c0_51, %c24] : memref<16x96xf32, #tpu.memory_space<vmem>>, vector<16x8xf32>
    %c0_52 = arith.constant 0 : index
    %c56 = arith.constant 56 : index
    %91 = vector.load %arg21[%c0_52, %c56] : memref<16x96xf32, #tpu.memory_space<vmem>>, vector<16x8xf32>
    %c0_53 = arith.constant 0 : index
    %c88 = arith.constant 88 : index
    %92 = vector.load %arg21[%c0_53, %c88] : memref<16x96xf32, #tpu.memory_space<vmem>>, vector<16x8xf32>
    %cst_54 = arith.constant dense<0.000000e+00> : vector<16x16xf32>
    %93 = tpu.matmul %90, %91, %cst_54 {dimension_numbers = #tpu.dot_dimension_numbers<[1], [1], [0], [0], [0, 0, 1, 0], [], []>} : vector<16x8xf32>, vector<16x8xf32>, vector<16x16xf32> -> vector<16x16xf32>
    %94 = arith.addf %93, %4 : vector<16x16xf32>
    %cst_55 = arith.constant dense<0xFF800000> : vector<16xf32>
    %95 = vector.multi_reduction <maximumf>, %94, %cst_55 [1] : vector<16x16xf32> to vector<16xf32>
    %96 = vector.shape_cast %95 : vector<16xf32> to vector<16x1xf32>
    %97 = vector.broadcast %96 : vector<16x1xf32> to vector<16x16xf32>
    %98 = arith.subf %94, %97 : vector<16x16xf32>
    %99 = math.exp %98 : vector<16x16xf32>
    %cst_56 = arith.constant dense<0.000000e+00> : vector<16xf32>
    %100 = vector.multi_reduction <add>, %99, %cst_56 [1] : vector<16x16xf32> to vector<16xf32>
    %101 = vector.shape_cast %100 : vector<16xf32> to vector<16x1xf32>
    %102 = tpu.reciprocal %101 {approx = true} : vector<16x1xf32> -> vector<16x1xf32>
    %103 = vector.broadcast %102 : vector<16x1xf32> to vector<16x16xf32>
    %104 = arith.mulf %99, %103 : vector<16x16xf32>
    %cst_57 = arith.constant dense<0.000000e+00> : vector<16x8xf32>
    %105 = tpu.matmul %104, %92, %cst_57 {dimension_numbers = #tpu.dot_dimension_numbers<[1], [0], [0], [1], [0, 0, 1, 1], [], []>} : vector<16x16xf32>, vector<16x8xf32>, vector<16x8xf32> -> vector<16x8xf32>
    %c0_58 = arith.constant 0 : index
    %c24_59 = arith.constant 24 : index
    %106 = vector.load %arg22[%c0_58, %c24_59] : memref<16x32xf32, #tpu.memory_space<vmem>>, vector<16x8xf32>
    tpu.vector_store %arg22[%c0_58, %c24_59], %105 {strides = array<i32>} : memref<16x32xf32, #tpu.memory_space<vmem>>, vector<16x8xf32>,
    %c0_60 = arith.constant 0 : index
    %c0_61 = arith.constant 0 : index
    %107 = vector.load %arg22[%c0_60, %c0_61] : memref<16x32xf32, #tpu.memory_space<vmem>>, vector<16x32xf32>
    %c0_62 = arith.constant 0 : index
    %c0_63 = arith.constant 0 : index
    %c0_64 = arith.constant 0 : index
    %108 = vector.load %arg7[%c0_62, %c0_63, %c0_64] : memref<1x32x32xf32, #tpu.memory_space<vmem>>, vector<1x32x32xf32>
    %109 = vector.shape_cast %108 : vector<1x32x32xf32> to vector<32x32xf32>
    %cst_65 = arith.constant dense<0.000000e+00> : vector<16x32xf32>
    %110 = tpu.matmul %107, %109, %cst_65 {dimension_numbers = #tpu.dot_dimension_numbers<[1], [0], [0], [1], [0, 0, 1, 1], [], []>} : vector<16x32xf32>, vector<32x32xf32>, vector<16x32xf32> -> vector<16x32xf32>
    %c0_66 = arith.constant 0 : index
    %c0_67 = arith.constant 0 : index
    %c0_68 = arith.constant 0 : index
    %111 = vector.load %arg8[%c0_66, %c0_67, %c0_68] : memref<1x1x32xf32, #tpu.memory_space<vmem>>, vector<1x1x32xf32>
    %112 = vector.shape_cast %111 : vector<1x1x32xf32> to vector<1x32xf32>
    %113 = vector.broadcast %112 : vector<1x32xf32> to vector<16x32xf32>
    %114 = arith.addf %110, %113 : vector<16x32xf32>
    %115 = arith.addf %3, %114 : vector<16x32xf32>
    %c0_69 = arith.constant 0 : index
    %c0_70 = arith.constant 0 : index
    %c0_71 = arith.constant 0 : index
    %116 = vector.load %arg11[%c0_69, %c0_70, %c0_71] : memref<1x1x32xf32, #tpu.memory_space<vmem>>, vector<1x1x32xf32>
    %117 = vector.shape_cast %116 : vector<1x1x32xf32> to vector<1x32xf32>
    %c0_72 = arith.constant 0 : index
    %c0_73 = arith.constant 0 : index
    %c0_74 = arith.constant 0 : index
    %118 = vector.load %arg12[%c0_72, %c0_73, %c0_74] : memref<1x1x32xf32, #tpu.memory_space<vmem>>, vector<1x1x32xf32>
    %119 = vector.shape_cast %118 : vector<1x1x32xf32> to vector<1x32xf32>
    %cst_75 = arith.constant dense<0.000000e+00> : vector<16xf32>
    %120 = vector.multi_reduction <add>, %115, %cst_75 [1] : vector<16x32xf32> to vector<16xf32>
    %121 = vector.shape_cast %120 : vector<16xf32> to vector<16x1xf32>
    %cst_76 = arith.constant 3.200000e+01 : f32
    %122 = vector.broadcast %cst_76 : f32 to vector<16x1xf32>
    %123 = arith.divf %121, %122 : vector<16x1xf32>
    %124 = vector.broadcast %123 : vector<16x1xf32> to vector<16x32xf32>
    %125 = arith.subf %115, %124 : vector<16x32xf32>
    %126 = arith.mulf %125, %125 : vector<16x32xf32>
    %cst_77 = arith.constant dense<0.000000e+00> : vector<16xf32>
    %127 = vector.multi_reduction <add>, %126, %cst_77 [1] : vector<16x32xf32> to vector<16xf32>
    %128 = vector.shape_cast %127 : vector<16xf32> to vector<16x1xf32>
    %cst_78 = arith.constant 3.200000e+01 : f32
    %129 = vector.broadcast %cst_78 : f32 to vector<16x1xf32>
    %130 = arith.divf %128, %129 : vector<16x1xf32>
    %131 = vector.broadcast %123 : vector<16x1xf32> to vector<16x32xf32>
    %132 = arith.subf %115, %131 : vector<16x32xf32>
    %cst_79 = arith.constant 9.99999996E-13 : f32
    %133 = vector.broadcast %cst_79 : f32 to vector<16x1xf32>
    %134 = arith.addf %130, %133 : vector<16x1xf32>
    %135 = math.rsqrt %134 : vector<16x1xf32>
    %136 = vector.broadcast %135 : vector<16x1xf32> to vector<16x32xf32>
    %137 = arith.mulf %132, %136 : vector<16x32xf32>
    %138 = vector.broadcast %117 : vector<1x32xf32> to vector<16x32xf32>
    %139 = arith.mulf %137, %138 : vector<16x32xf32>
    %140 = vector.broadcast %119 : vector<1x32xf32> to vector<16x32xf32>
    %141 = arith.addf %139, %140 : vector<16x32xf32>
    %c0_80 = arith.constant 0 : index
    %c0_81 = arith.constant 0 : index
    %c0_82 = arith.constant 0 : index
    %142 = vector.load %arg13[%c0_80, %c0_81, %c0_82] : memref<1x32x128xf32, #tpu.memory_space<vmem>>, vector<1x32x128xf32>
    %143 = vector.shape_cast %142 : vector<1x32x128xf32> to vector<32x128xf32>
    %cst_83 = arith.constant dense<0.000000e+00> : vector<16x128xf32>
    %144 = tpu.matmul %141, %143, %cst_83 {dimension_numbers = #tpu.dot_dimension_numbers<[1], [0], [0], [1], [0, 0, 1, 1], [], []>} : vector<16x32xf32>, vector<32x128xf32>, vector<16x128xf32> -> vector<16x128xf32>
    %c0_84 = arith.constant 0 : index
    %c0_85 = arith.constant 0 : index
    %c0_86 = arith.constant 0 : index
    %145 = vector.load %arg14[%c0_84, %c0_85, %c0_86] : memref<1x1x128xf32, #tpu.memory_space<vmem>>, vector<1x1x128xf32>
    %146 = vector.shape_cast %145 : vector<1x1x128xf32> to vector<1x128xf32>
    %147 = vector.broadcast %146 : vector<1x128xf32> to vector<16x128xf32>
    %148 = arith.addf %144, %147 : vector<16x128xf32>
    %149 = arith.mulf %148, %148 : vector<16x128xf32>
    %150 = arith.mulf %148, %149 : vector<16x128xf32>
    %cst_87 = arith.constant 4.471500e-02 : f32
    %151 = vector.broadcast %cst_87 : f32 to vector<16x128xf32>
    %152 = arith.mulf %151, %150 : vector<16x128xf32>
    %153 = arith.addf %148, %152 : vector<16x128xf32>
    %cst_88 = arith.constant 0.797884583 : f32
    %154 = vector.broadcast %cst_88 : f32 to vector<16x128xf32>
    %155 = arith.mulf %154, %153 : vector<16x128xf32>
    %156 = math.tanh %155 : vector<16x128xf32>
    %cst_89 = arith.constant 1.000000e+00 : f32
    %157 = vector.broadcast %cst_89 : f32 to vector<16x128xf32>
    %158 = arith.addf %157, %156 : vector<16x128xf32>
    %cst_90 = arith.constant 5.000000e-01 : f32
    %159 = vector.broadcast %cst_90 : f32 to vector<16x128xf32>
    %160 = arith.mulf %159, %158 : vector<16x128xf32>
    %161 = arith.mulf %148, %160 : vector<16x128xf32>
    %c0_91 = arith.constant 0 : index
    %c0_92 = arith.constant 0 : index
    %c0_93 = arith.constant 0 : index
    %162 = vector.load %arg15[%c0_91, %c0_92, %c0_93] : memref<1x128x32xf32, #tpu.memory_space<vmem>>, vector<1x128x32xf32>
    %163 = vector.shape_cast %162 : vector<1x128x32xf32> to vector<128x32xf32>
    %cst_94 = arith.constant dense<0.000000e+00> : vector<16x32xf32>
    %164 = tpu.matmul %161, %163, %cst_94 {dimension_numbers = #tpu.dot_dimension_numbers<[1], [0], [0], [1], [0, 0, 1, 1], [], []>} : vector<16x128xf32>, vector<128x32xf32>, vector<16x32xf32> -> vector<16x32xf32>
    %165 = arith.addf %115, %164 : vector<16x32xf32>
    %c0_95 = arith.constant 0 : index
    %c0_96 = arith.constant 0 : index
    %c0_97 = arith.constant 0 : index
    %166 = vector.load %arg16[%c0_95, %c0_96, %c0_97] : memref<1x1x32xf32, #tpu.memory_space<vmem>>, vector<1x1x32xf32>
    %167 = vector.shape_cast %166 : vector<1x1x32xf32> to vector<1x32xf32>
    %168 = vector.broadcast %167 : vector<1x32xf32> to vector<16x32xf32>
    %169 = arith.addf %165, %168 : vector<16x32xf32>
    %c0_98 = arith.constant 0 : index
    %c0_99 = arith.constant 0 : index
    %170 = vector.load %arg20[%c0_98, %c0_99] : memref<16x32xf32, #tpu.memory_space<vmem>>, vector<16x32xf32>
    tpu.vector_store %arg20[%c0_98, %c0_99], %169 {strides = array<i32>} : memref<16x32xf32, #tpu.memory_space<vmem>>, vector<16x32xf32>,
    %c1_i32 = arith.constant 1 : i32
    %171 = arith.cmpi eq, %arg0, %c1_i32 : i32
    %172 = arith.extui %171 : i1 to i32
    %c0_i32_100 = arith.constant 0 : i32
    %173 = arith.cmpi ne, %172, %c0_i32_100 : i32
    scf.if %173 {
      %c0_101 = arith.constant 0 : index
      %c0_102 = arith.constant 0 : index
      %174 = vector.load %arg17[%c0_101, %c0_102] : memref<1x32xf32, #tpu.memory_space<vmem>>, vector<1x32xf32>
      %c0_103 = arith.constant 0 : index
      %c0_104 = arith.constant 0 : index
      %175 = vector.load %arg18[%c0_103, %c0_104] : memref<1x32xf32, #tpu.memory_space<vmem>>, vector<1x32xf32>
      %cst_105 = arith.constant dense<0.000000e+00> : vector<16xf32>
      %176 = vector.multi_reduction <add>, %169, %cst_105 [1] : vector<16x32xf32> to vector<16xf32>
      %177 = vector.shape_cast %176 : vector<16xf32> to vector<16x1xf32>
      %cst_106 = arith.constant 3.200000e+01 : f32
      %178 = vector.broadcast %cst_106 : f32 to vector<16x1xf32>
      %179 = arith.divf %177, %178 : vector<16x1xf32>
      %180 = vector.broadcast %179 : vector<16x1xf32> to vector<16x32xf32>
      %181 = arith.subf %169, %180 : vector<16x32xf32>
      %182 = arith.mulf %181, %181 : vector<16x32xf32>
      %cst_107 = arith.constant dense<0.000000e+00> : vector<16xf32>
      %183 = vector.multi_reduction <add>, %182, %cst_107 [1] : vector<16x32xf32> to vector<16xf32>
      %184 = vector.shape_cast %183 : vector<16xf32> to vector<16x1xf32>
      %cst_108 = arith.constant 3.200000e+01 : f32
      %185 = vector.broadcast %cst_108 : f32 to vector<16x1xf32>
      %186 = arith.divf %184, %185 : vector<16x1xf32>
      %187 = vector.broadcast %179 : vector<16x1xf32> to vector<16x32xf32>
      %188 = arith.subf %169, %187 : vector<16x32xf32>
      %cst_109 = arith.constant 9.99999996E-13 : f32
      %189 = vector.broadcast %cst_109 : f32 to vector<16x1xf32>
      %190 = arith.addf %186, %189 : vector<16x1xf32>
      %191 = math.rsqrt %190 : vector<16x1xf32>
      %192 = vector.broadcast %191 : vector<16x1xf32> to vector<16x32xf32>
      %193 = arith.mulf %188, %192 : vector<16x32xf32>
      %194 = vector.broadcast %174 : vector<1x32xf32> to vector<16x32xf32>
      %195 = arith.mulf %193, %194 : vector<16x32xf32>
      %196 = vector.broadcast %175 : vector<1x32xf32> to vector<16x32xf32>
      %197 = arith.addf %195, %196 : vector<16x32xf32>
      %c0_110 = arith.constant 0 : index
      %c0_111 = arith.constant 0 : index
      %198 = vector.load %arg19[%c0_110, %c0_111] : memref<16x32xf32, #tpu.memory_space<vmem>>, vector<16x32xf32>
      tpu.vector_store %arg19[%c0_110, %c0_111], %197 {strides = array<i32>} : memref<16x32xf32, #tpu.memory_space<vmem>>, vector<16x32xf32>,
    } else {
    }
    return
  }
  func.func @transform_0(%arg0: i32) -> (i32, i32) {
    %c0_i32 = arith.constant 0 : i32
    %c0_i32_0 = arith.constant 0 : i32
    %c0_i32_1 = arith.constant 0 : i32
    return %c0_i32, %c0_i32_0 : i32, i32
  }
  func.func @transform_1(%arg0: i32) -> (i32, i32) {
    %c0_i32 = arith.constant 0 : i32
    %c0_i32_0 = arith.constant 0 : i32
    %c0_i32_1 = arith.constant 0 : i32
    return %c0_i32, %c0_i32_0 : i32, i32
  }
  func.func @transform_2(%arg0: i32) -> (i32, i32) {
    %c0_i32 = arith.constant 0 : i32
    %c0_i32_0 = arith.constant 0 : i32
    %c0_i32_1 = arith.constant 0 : i32
    return %c0_i32, %c0_i32_0 : i32, i32
  }
  func.func @transform_3(%arg0: i32) -> (i32, i32) {
    %c0_i32 = arith.constant 0 : i32
    %c0_i32_0 = arith.constant 0 : i32
    %c0_i32_1 = arith.constant 0 : i32
    return %c0_i32, %c0_i32_0 : i32, i32
  }
  func.func @transform_4(%arg0: i32) -> (i32, i32, i32) {
    %c0_i32 = arith.constant 0 : i32
    %c0_i32_0 = arith.constant 0 : i32
    %c0_i32_1 = arith.constant 0 : i32
    return %arg0, %c0_i32, %c0_i32_0 : i32, i32, i32
  }
  func.func @transform_5(%arg0: i32) -> (i32, i32, i32) {
    %c0_i32 = arith.constant 0 : i32
    %c0_i32_0 = arith.constant 0 : i32
    %c0_i32_1 = arith.constant 0 : i32
    return %arg0, %c0_i32, %c0_i32_0 : i32, i32, i32
  }
  func.func @transform_6(%arg0: i32) -> (i32, i32, i32) {
    %c0_i32 = arith.constant 0 : i32
    %c0_i32_0 = arith.constant 0 : i32
    %c0_i32_1 = arith.constant 0 : i32
    return %arg0, %c0_i32, %c0_i32_0 : i32, i32, i32
  }
  func.func @transform_7(%arg0: i32) -> (i32, i32, i32) {
    %c0_i32 = arith.constant 0 : i32
    %c0_i32_0 = arith.constant 0 : i32
    %c0_i32_1 = arith.constant 0 : i32
    return %arg0, %c0_i32, %c0_i32_0 : i32, i32, i32
  }
  func.func @transform_8(%arg0: i32) -> (i32, i32, i32) {
    %c0_i32 = arith.constant 0 : i32
    %c0_i32_0 = arith.constant 0 : i32
    %c0_i32_1 = arith.constant 0 : i32
    return %arg0, %c0_i32, %c0_i32_0 : i32, i32, i32
  }
  func.func @transform_9(%arg0: i32) -> (i32, i32, i32) {
    %c0_i32 = arith.constant 0 : i32
    %c0_i32_0 = arith.constant 0 : i32
    %c0_i32_1 = arith.constant 0 : i32
    return %arg0, %c0_i32, %c0_i32_0 : i32, i32, i32
  }
  func.func @transform_10(%arg0: i32) -> (i32, i32, i32) {
    %c0_i32 = arith.constant 0 : i32
    %c0_i32_0 = arith.constant 0 : i32
    %c0_i32_1 = arith.constant 0 : i32
    return %arg0, %c0_i32, %c0_i32_0 : i32, i32, i32
  }
  func.func @transform_11(%arg0: i32) -> (i32, i32, i32) {
    %c0_i32 = arith.constant 0 : i32
    %c0_i32_0 = arith.constant 0 : i32
    %c0_i32_1 = arith.constant 0 : i32
    return %arg0, %c0_i32, %c0_i32_0 : i32, i32, i32
  }
  func.func @transform_12(%arg0: i32) -> (i32, i32, i32) {
    %c0_i32 = arith.constant 0 : i32
    %c0_i32_0 = arith.constant 0 : i32
    %c0_i32_1 = arith.constant 0 : i32
    return %arg0, %c0_i32, %c0_i32_0 : i32, i32, i32
  }
  func.func @transform_13(%arg0: i32) -> (i32, i32, i32) {
    %c0_i32 = arith.constant 0 : i32
    %c0_i32_0 = arith.constant 0 : i32
    %c0_i32_1 = arith.constant 0 : i32
    return %arg0, %c0_i32, %c0_i32_0 : i32, i32, i32
  }
  func.func @transform_14(%arg0: i32) -> (i32, i32, i32) {
    %c0_i32 = arith.constant 0 : i32
    %c0_i32_0 = arith.constant 0 : i32
    %c0_i32_1 = arith.constant 0 : i32
    return %arg0, %c0_i32, %c0_i32_0 : i32, i32, i32
  }
  func.func @transform_15(%arg0: i32) -> (i32, i32, i32) {
    %c0_i32 = arith.constant 0 : i32
    %c0_i32_0 = arith.constant 0 : i32
    %c0_i32_1 = arith.constant 0 : i32
    return %arg0, %c0_i32, %c0_i32_0 : i32, i32, i32
  }
  func.func @transform_16(%arg0: i32) -> (i32, i32) {
    %c0_i32 = arith.constant 0 : i32
    %c0_i32_0 = arith.constant 0 : i32
    %c0_i32_1 = arith.constant 0 : i32
    return %c0_i32, %c0_i32_0 : i32, i32
  }
  func.func @transform_17(%arg0: i32) -> (i32, i32) {
    %c0_i32 = arith.constant 0 : i32
    %c0_i32_0 = arith.constant 0 : i32
    %c0_i32_1 = arith.constant 0 : i32
    return %c0_i32, %c0_i32_0 : i32, i32
  }
  func.func @transform_18(%arg0: i32) -> (i32, i32) {
    %c0_i32 = arith.constant 0 : i32
    %c0_i32_0 = arith.constant 0 : i32
    %c0_i32_1 = arith.constant 0 : i32
    return %c0_i32, %c0_i32_0 : i32, i32
  }
}

</mosaic_0001>

<llo_original>
// kernel: sub.1
$region0: #{sub.1}
  #allocation0 [shape = 's32[1]{0}', space=sflag, size = 0x4, scoped, tag = 'scoped memory for sub.1']
  %s0 = inlined_call_operand.vmem [shape: f32[32], index: 0, kind: input, shape index: {}]
  %s1 = inlined_call_operand.vmem [shape: f32[32], index: 1, kind: input, shape index: {}]
  %s2 = inlined_call_operand.vmem [shape: f32[32], index: 2, kind: output, shape index: {}]
  %v3 = vld [vmem:[%s0] sm:$0x1]
  %v4 = vld [vmem:[%s1] sm:$0x1]
  %5 = xla_tuple %v3, %v4
  %6 = xla_tuple %5
  %v7 = vsub.f32 %v3, %v4
  %8 = xla_tuple %v7
  %9 = vst [vmem:[%s2] sm:$0x1] %v7

// kernel: vit_encoder_forward.1
$region0: #{vit_encoder_forward.1}
  #allocation0 [shape = 'u32[]', space=smem, size = 0x4, offset = 0x4, fixed_abs, tag = 'smem constant byte address 0x4 - core index']
  #allocation1 [shape = 'u32[72,128]{1,0:T(1,128)}', space=vmem, size = 0x9000, scoped, tag = 'internal scratch']
  #allocation2 [shape = 'f32[16,32]{1,0:T(8,128)}', space=vmem, size = 0x2000, scoped, tag = 'scratch operand']
  #allocation3 [shape = 'f32[16,96]{1,0:T(8,128)}', space=vmem, size = 0x2000, scoped, tag = 'scratch operand']
  #allocation4 [shape = 'f32[16,32]{1,0:T(8,128)}', space=vmem, size = 0x2000, scoped, tag = 'scratch operand']
  %s0 = inlined_call_operand.vmem [shape: f32[16,768], index: 0, kind: input, shape index: {}]
  %s1 = inlined_call_operand.vmem [shape: f32[768,32], index: 1, kind: input, shape index: {}]
  %s2 = inlined_call_operand.vmem [shape: f32[16,32], index: 2, kind: input, shape index: {}]
  %s3 = inlined_call_operand.vmem [shape: f32[16,16], index: 3, kind: input, shape index: {}]
  %s4 = inlined_call_operand.vmem [shape: f32[2,32,96], index: 4, kind: input, shape index: {}]
  %s5 = inlined_call_operand.vmem [shape: f32[2,1,96], index: 5, kind: input, shape index: {}]
  %s6 = inlined_call_operand.vmem [shape: f32[2,32,32], index: 6, kind: input, shape index: {}]
  %s7 = inlined_call_operand.vmem [shape: f32[2,1,32], index: 7, kind: input, shape index: {}]
  %s8 = inlined_call_operand.vmem [shape: f32[2,1,32], index: 8, kind: input, shape index: {}]
  %s9 = inlined_call_operand.vmem [shape: f32[2,1,32], index: 9, kind: input, shape index: {}]
  %s10 = inlined_call_operand.vmem [shape: f32[2,1,32], index: 10, kind: input, shape index: {}]
  %s11 = inlined_call_operand.vmem [shape: f32[2,1,32], index: 11, kind: input, shape index: {}]
  %s12 = inlined_call_operand.vmem [shape: f32[2,32,128], index: 12, kind: input, shape index: {}]
  %s13 = inlined_call_operand.vmem [shape: f32[2,1,128], index: 13, kind: input, shape index: {}]
  %s14 = inlined_call_operand.vmem [shape: f32[2,128,32], index: 14, kind: input, shape index: {}]
  %s15 = inlined_call_operand.vmem [shape: f32[2,1,32], index: 15, kind: input, shape index: {}]
  %s16 = inlined_call_operand.vmem [shape: f32[1,32], index: 16, kind: input, shape index: {}]
  %s17 = inlined_call_operand.vmem [shape: f32[1,32], index: 17, kind: input, shape index: {}]
  %s18 = inlined_call_operand.vmem [shape: f32[16,32], index: 18, kind: output, shape index: {}]
  %s19 = sld [smem:[#allocation0]]
  $region113: #{vit_encoder_forward.1} parent=0
    _
  %s21 = ssub.s32 1, %s19
  %s22 = scalar_select 0, %s21, %s19
  loop: start=0, step=1, limit=4
  $region2: #{vit_encoder_forward.1} parent=0 // loop_pre_header
    _
  $region3: #{vit_encoder_forward.1} parent=0 // loop_header
    %s24 = sphi 0, %s28
    %p25 = scmp.ge.s32.totalorder %s24, 4
    %s32 = sphi 0, %s32
    %s34 = sphi 0, %s32
    %s35 = sphi 0, %s34
    %s49 = sphi 0, %s35
    %s53 = sphi 0, %s53
    %s55 = sphi 0, %s53
    %s56 = sphi 0, %s55
    %s70 = sphi 0, %s56
    %s74 = sphi 0, %s74
    %s76 = sphi 0, %s74
    %s77 = sphi 0, %s76
    %s91 = sphi 0, %s77
    %s95 = sphi 0, %s95
    %s97 = sphi 0, %s95
    %s98 = sphi 0, %s97
    %s112 = sphi 0, %s98
    %s118 = sphi 0, %s120
    %s121 = sphi 0, %s118
    %s122 = sphi 0, %s121
    %s138 = sphi 0, %s122
    %s144 = sphi 0, %s146
    %s147 = sphi 0, %s144
    %s148 = sphi 0, %s147
    %s164 = sphi 0, %s148
    %s170 = sphi 0, %s172
    %s173 = sphi 0, %s170
    %s174 = sphi 0, %s173
    %s190 = sphi 0, %s174
    %s196 = sphi 0, %s198
    %s199 = sphi 0, %s196
    %s200 = sphi 0, %s199
    %s216 = sphi 0, %s200
    %s222 = sphi 0, %s224
    %s225 = sphi 0, %s222
    %s226 = sphi 0, %s225
    %s242 = sphi 0, %s226
    %s248 = sphi 0, %s250
    %s251 = sphi 0, %s248
    %s252 = sphi 0, %s251
    %s268 = sphi 0, %s252
    %s274 = sphi 0, %s276
    %s277 = sphi 0, %s274
    %s278 = sphi 0, %s277
    %s294 = sphi 0, %s278
    %s300 = sphi 0, %s302
    %s303 = sphi 0, %s300
    %s304 = sphi 0, %s303
    %s320 = sphi 0, %s304
    %s326 = sphi 0, %s328
    %s329 = sphi 0, %s326
    %s330 = sphi 0, %s329
    %s346 = sphi 0, %s330
    %s352 = sphi 0, %s354
    %s355 = sphi 0, %s352
    %s356 = sphi 0, %s355
    %s372 = sphi 0, %s356
    %s378 = sphi 0, %s380
    %s381 = sphi 0, %s378
    %s382 = sphi 0, %s381
    %s398 = sphi 0, %s382
    %s404 = sphi 0, %s406
    %s407 = sphi 0, %s404
    %s408 = sphi 0, %s407
    %s424 = sphi 0, %s408
    %s428 = sphi 0, %s428
    %s430 = sphi 0, %s428
    %s431 = sphi 0, %s430
    %s445 = sphi 0, %s431
    %s449 = sphi 0, %s449
    %s451 = sphi 0, %s449
    %s452 = sphi 0, %s451
    %s466 = sphi 0, %s452
    %s470 = sphi 0, %s470
    %s472 = sphi 0, %s470
    %s473 = sphi 0, %s472
    %s487 = sphi 0, %s473
  $region4: #{vit_encoder_forward.1} parent=0 // loop_header_branch
    %27 = sbr.rel (%p25) target = $region8
  $region5: #{vit_encoder_forward.1} parent=0 // loop_body
    %s29 = ssub.s32 %s24, 1
    %s30 = ssub.s32 %s24, 2
    %s31 = sadd.s32 %s24, 1
    %s33 = sadd.s32 %s32, 1
    %p36 = scmp.eq.s32.totalorder %s24, 1
    %p37 = scmp.ne.s32.totalorder %s32, %s34
    %p38 = scmp.eq.s32.totalorder %s24, 0
    %p39 = por %p37, %p38
    %p40 = scmp.ne.s32.totalorder %s32, %s34
    %p41 = scmp.eq.s32.totalorder %s29, 1
    %p42 = por %p40, %p41
    %p43 = scmp.ne.s32.totalorder %s34, %s35
    %p44 = scmp.eq.s32.totalorder %s29, 0
    %p45 = por %p43, %p44
    %p46 = scmp.ne.s32.totalorder %s34, %s35
    %p47 = scmp.eq.s32.totalorder %s30, 1
    %p48 = por %p46, %p47
    %p50 = scmp.ne.s32.totalorder %s35, %s49
    %p51 = scmp.eq.s32.totalorder %s30, 0
    %p52 = por %p50, %p51
    %s54 = sadd.s32 %s53, 1
    %p57 = scmp.eq.s32.totalorder %s24, 1
    %p58 = scmp.ne.s32.totalorder %s53, %s55
    %p59 = scmp.eq.s32.totalorder %s24, 0
    %p60 = por %p58, %p59
    %p61 = scmp.ne.s32.totalorder %s53, %s55
    %p62 = scmp.eq.s32.totalorder %s29, 1
    %p63 = por %p61, %p62
    %p64 = scmp.ne.s32.totalorder %s55, %s56
    %p65 = scmp.eq.s32.totalorder %s29, 0
    %p66 = por %p64, %p65
    %p67 = scmp.ne.s32.totalorder %s55, %s56
    %p68 = scmp.eq.s32.totalorder %s30, 1
    %p69 = por %p67, %p68
    %p71 = scmp.ne.s32.totalorder %s56, %s70
    %p72 = scmp.eq.s32.totalorder %s30, 0
    %p73 = por %p71, %p72
    %s75 = sadd.s32 %s74, 1
    %p78 = scmp.eq.s32.totalorder %s24, 1
    %p79 = scmp.ne.s32.totalorder %s74, %s76
    %p80 = scmp.eq.s32.totalorder %s24, 0
    %p81 = por %p79, %p80
    %p82 = scmp.ne.s32.totalorder %s74, %s76
    %p83 = scmp.eq.s32.totalorder %s29, 1
    %p84 = por %p82, %p83
    %p85 = scmp.ne.s32.totalorder %s76, %s77
    %p86 = scmp.eq.s32.totalorder %s29, 0
    %p87 = por %p85, %p86
    %p88 = scmp.ne.s32.totalorder %s76, %s77
    %p89 = scmp.eq.s32.totalorder %s30, 1
    %p90 = por %p88, %p89
    %p92 = scmp.ne.s32.totalorder %s77, %s91
    %p93 = scmp.eq.s32.totalorder %s30, 0
    %p94 = por %p92, %p93
    %s96 = sadd.s32 %s95, 1
    %p99 = scmp.eq.s32.totalorder %s24, 1
    %p100 = scmp.ne.s32.totalorder %s95, %s97
    %p101 = scmp.eq.s32.totalorder %s24, 0
    %p102 = por %p100, %p101
    %p103 = scmp.ne.s32.totalorder %s95, %s97
    %p104 = scmp.eq.s32.totalorder %s29, 1
    %p105 = por %p103, %p104
    %p106 = scmp.ne.s32.totalorder %s97, %s98
    %p107 = scmp.eq.s32.totalorder %s29, 0
    %p108 = por %p106, %p107
    %p109 = scmp.ne.s32.totalorder %s97, %s98
    %p110 = scmp.eq.s32.totalorder %s30, 1
    %p111 = por %p109, %p110
    %p113 = scmp.ne.s32.totalorder %s98, %s112
    %p114 = scmp.eq.s32.totalorder %s30, 0
    %p115 = por %p113, %p114
    %s116 = ssub.s32 %s24, %s31
    %p117 = scmp.eq.s32.totalorder %s116, 0
    %s119 = sadd.s32 %s118, 1
    %s120 = scalar_select %p117, %s118, %s119
    %p123 = pneg %p117
    %p124 = scmp.eq.s32.totalorder %s24, 1
    %p125 = por %p123, %p124
    %p126 = scmp.ne.s32.totalorder %s118, %s121
    %p127 = scmp.eq.s32.totalorder %s24, 0
    %p128 = por %p126, %p127
    %p129 = scmp.ne.s32.totalorder %s118, %s121
    %p130 = scmp.eq.s32.totalorder %s29, 1
    %p131 = por %p129, %p130
    %p132 = scmp.ne.s32.totalorder %s121, %s122
    %p133 = scmp.eq.s32.totalorder %s29, 0
    %p134 = por %p132, %p133
    %p135 = scmp.ne.s32.totalorder %s121, %s122
    %p136 = scmp.eq.s32.totalorder %s30, 1
    %p137 = por %p135, %p136
    %p139 = scmp.ne.s32.totalorder %s122, %s138
    %p140 = scmp.eq.s32.totalorder %s30, 0
    %p141 = por %p139, %p140
    %s142 = ssub.s32 %s24, %s31
    %p143 = scmp.eq.s32.totalorder %s142, 0
    %s145 = sadd.s32 %s144, 1
    %s146 = scalar_select %p143, %s144, %s145
    %p149 = pneg %p143
    %p150 = scmp.eq.s32.totalorder %s24, 1
    %p151 = por %p149, %p150
    %p152 = scmp.ne.s32.totalorder %s144, %s147
    %p153 = scmp.eq.s32.totalorder %s24, 0
    %p154 = por %p152, %p153
    %p155 = scmp.ne.s32.totalorder %s144, %s147
    %p156 = scmp.eq.s32.totalorder %s29, 1
    %p157 = por %p155, %p156
    %p158 = scmp.ne.s32.totalorder %s147, %s148
    %p159 = scmp.eq.s32.totalorder %s29, 0
    %p160 = por %p158, %p159
    %p161 = scmp.ne.s32.totalorder %s147, %s148
    %p162 = scmp.eq.s32.totalorder %s30, 1
    %p163 = por %p161, %p162
    %p165 = scmp.ne.s32.totalorder %s148, %s164
    %p166 = scmp.eq.s32.totalorder %s30, 0
    %p167 = por %p165, %p166
    %s168 = ssub.s32 %s24, %s31
    %p169 = scmp.eq.s32.totalorder %s168, 0
    %s171 = sadd.s32 %s170, 1
    %s172 = scalar_select %p169, %s170, %s171
    %p175 = pneg %p169
    %p176 = scmp.eq.s32.totalorder %s24, 1
    %p177 = por %p175, %p176
    %p178 = scmp.ne.s32.totalorder %s170, %s173
    %p179 = scmp.eq.s32.totalorder %s24, 0
    %p180 = por %p178, %p179
    %p181 = scmp.ne.s32.totalorder %s170, %s173
    %p182 = scmp.eq.s32.totalorder %s29, 1
    %p183 = por %p181, %p182
    %p184 = scmp.ne.s32.totalorder %s173, %s174
    %p185 = scmp.eq.s32.totalorder %s29, 0
    %p186 = por %p184, %p185
    %p187 = scmp.ne.s32.totalorder %s173, %s174
    %p188 = scmp.eq.s32.totalorder %s30, 1
    %p189 = por %p187, %p188
    %p191 = scmp.ne.s32.totalorder %s174, %s190
    %p192 = scmp.eq.s32.totalorder %s30, 0
    %p193 = por %p191, %p192
    %s194 = ssub.s32 %s24, %s31
    %p195 = scmp.eq.s32.totalorder %s194, 0
    %s197 = sadd.s32 %s196, 1
    %s198 = scalar_select %p195, %s196, %s197
    %p201 = pneg %p195
    %p202 = scmp.eq.s32.totalorder %s24, 1
    %p203 = por %p201, %p202
    %p204 = scmp.ne.s32.totalorder %s196, %s199
    %p205 = scmp.eq.s32.totalorder %s24, 0
    %p206 = por %p204, %p205
    %p207 = scmp.ne.s32.totalorder %s196, %s199
    %p208 = scmp.eq.s32.totalorder %s29, 1
    %p209 = por %p207, %p208
    %p210 = scmp.ne.s32.totalorder %s199, %s200
    %p211 = scmp.eq.s32.totalorder %s29, 0
    %p212 = por %p210, %p211
    %p213 = scmp.ne.s32.totalorder %s199, %s200
    %p214 = scmp.eq.s32.totalorder %s30, 1
    %p215 = por %p213, %p214
    %p217 = scmp.ne.s32.totalorder %s200, %s216
    %p218 = scmp.eq.s32.totalorder %s30, 0
    %p219 = por %p217, %p218
    %s220 = ssub.s32 %s24, %s31
    %p221 = scmp.eq.s32.totalorder %s220, 0
    %s223 = sadd.s32 %s222, 1
    %s224 = scalar_select %p221, %s222, %s223
    %p227 = pneg %p221
    %p228 = scmp.eq.s32.totalorder %s24, 1
    %p229 = por %p227, %p228
    %p230 = scmp.ne.s32.totalorder %s222, %s225
    %p231 = scmp.eq.s32.totalorder %s24, 0
    %p232 = por %p230, %p231
    %p233 = scmp.ne.s32.totalorder %s222, %s225
    %p234 = scmp.eq.s32.totalorder %s29, 1
    %p235 = por %p233, %p234
    %p236 = scmp.ne.s32.totalorder %s225, %s226
    %p237 = scmp.eq.s32.totalorder %s29, 0
    %p238 = por %p236, %p237
    %p239 = scmp.ne.s32.totalorder %s225, %s226
    %p240 = scmp.eq.s32.totalorder %s30, 1
    %p241 = por %p239, %p240
    %p243 = scmp.ne.s32.totalorder %s226, %s242
    %p244 = scmp.eq.s32.totalorder %s30, 0
    %p245 = por %p243, %p244
    %s246 = ssub.s32 %s24, %s31
    %p247 = scmp.eq.s32.totalorder %s246, 0
    %s249 = sadd.s32 %s248, 1
    %s250 = scalar_select %p247, %s248, %s249
    %p253 = pneg %p247
    %p254 = scmp.eq.s32.totalorder %s24, 1
    %p255 = por %p253, %p254
    %p256 = scmp.ne.s32.totalorder %s248, %s251
    %p257 = scmp.eq.s32.totalorder %s24, 0
    %p258 = por %p256, %p257
    %p259 = scmp.ne.s32.totalorder %s248, %s251
    %p260 = scmp.eq.s32.totalorder %s29, 1
    %p261 = por %p259, %p260
    %p262 = scmp.ne.s32.totalorder %s251, %s252
    %p263 = scmp.eq.s32.totalorder %s29, 0
    %p264 = por %p262, %p263
    %p265 = scmp.ne.s32.totalorder %s251, %s252
    %p266 = scmp.eq.s32.totalorder %s30, 1
    %p267 = por %p265, %p266
    %p269 = scmp.ne.s32.totalorder %s252, %s268
    %p270 = scmp.eq.s32.totalorder %s30, 0
    %p271 = por %p269, %p270
    %s272 = ssub.s32 %s24, %s31
    %p273 = scmp.eq.s32.totalorder %s272, 0
    %s275 = sadd.s32 %s274, 1
    %s276 = scalar_select %p273, %s274, %s275
    %p279 = pneg %p273
    %p280 = scmp.eq.s32.totalorder %s24, 1
    %p281 = por %p279, %p280
    %p282 = scmp.ne.s32.totalorder %s274, %s277
    %p283 = scmp.eq.s32.totalorder %s24, 0
    %p284 = por %p282, %p283
    %p285 = scmp.ne.s32.totalorder %s274, %s277
    %p286 = scmp.eq.s32.totalorder %s29, 1
    %p287 = por %p285, %p286
    %p288 = scmp.ne.s32.totalorder %s277, %s278
    %p289 = scmp.eq.s32.totalorder %s29, 0
    %p290 = por %p288, %p289
    %p291 = scmp.ne.s32.totalorder %s277, %s278
    %p292 = scmp.eq.s32.totalorder %s30, 1
    %p293 = por %p291, %p292
    %p295 = scmp.ne.s32.totalorder %s278, %s294
    %p296 = scmp.eq.s32.totalorder %s30, 0
    %p297 = por %p295, %p296
    %s298 = ssub.s32 %s24, %s31
    %p299 = scmp.eq.s32.totalorder %s298, 0
    %s301 = sadd.s32 %s300, 1
    %s302 = scalar_select %p299, %s300, %s301
    %p305 = pneg %p299
    %p306 = scmp.eq.s32.totalorder %s24, 1
    %p307 = por %p305, %p306
    %p308 = scmp.ne.s32.totalorder %s300, %s303
    %p309 = scmp.eq.s32.totalorder %s24, 0
    %p310 = por %p308, %p309
    %p311 = scmp.ne.s32.totalorder %s300, %s303
    %p312 = scmp.eq.s32.totalorder %s29, 1
    %p313 = por %p311, %p312
    %p314 = scmp.ne.s32.totalorder %s303, %s304
    %p315 = scmp.eq.s32.totalorder %s29, 0
    %p316 = por %p314, %p315
    %p317 = scmp.ne.s32.totalorder %s303, %s304
    %p318 = scmp.eq.s32.totalorder %s30, 1
    %p319 = por %p317, %p318
    %p321 = scmp.ne.s32.totalorder %s304, %s320
    %p322 = scmp.eq.s32.totalorder %s30, 0
    %p323 = por %p321, %p322
    %s324 = ssub.s32 %s24, %s31
    %p325 = scmp.eq.s32.totalorder %s324, 0
    %s327 = sadd.s32 %s326, 1
    %s328 = scalar_select %p325, %s326, %s327
    %p331 = pneg %p325
    %p332 = scmp.eq.s32.totalorder %s24, 1
    %p333 = por %p331, %p332
    %p334 = scmp.ne.s32.totalorder %s326, %s329
    %p335 = scmp.eq.s32.totalorder %s24, 0
    %p336 = por %p334, %p335
    %p337 = scmp.ne.s32.totalorder %s326, %s329
    %p338 = scmp.eq.s32.totalorder %s29, 1
    %p339 = por %p337, %p338
    %p340 = scmp.ne.s32.totalorder %s329, %s330
    %p341 = scmp.eq.s32.totalorder %s29, 0
    %p342 = por %p340, %p341
    %p343 = scmp.ne.s32.totalorder %s329, %s330
    %p344 = scmp.eq.s32.totalorder %s30, 1
    %p345 = por %p343, %p344
    %p347 = scmp.ne.s32.totalorder %s330, %s346
    %p348 = scmp.eq.s32.totalorder %s30, 0
    %p349 = por %p347, %p348
    %s350 = ssub.s32 %s24, %s31
    %p351 = scmp.eq.s32.totalorder %s350, 0
    %s353 = sadd.s32 %s352, 1
    %s354 = scalar_select %p351, %s352, %s353
    %p357 = pneg %p351
    %p358 = scmp.eq.s32.totalorder %s24, 1
    %p359 = por %p357, %p358
    %p360 = scmp.ne.s32.totalorder %s352, %s355
    %p361 = scmp.eq.s32.totalorder %s24, 0
    %p362 = por %p360, %p361
    %p363 = scmp.ne.s32.totalorder %s352, %s355
    %p364 = scmp.eq.s32.totalorder %s29, 1
    %p365 = por %p363, %p364
    %p366 = scmp.ne.s32.totalorder %s355, %s356
    %p367 = scmp.eq.s32.totalorder %s29, 0
    %p368 = por %p366, %p367
    %p369 = scmp.ne.s32.totalorder %s355, %s356
    %p370 = scmp.eq.s32.totalorder %s30, 1
    %p371 = por %p369, %p370
    %p373 = scmp.ne.s32.totalorder %s356, %s372
    %p374 = scmp.eq.s32.totalorder %s30, 0
    %p375 = por %p373, %p374
    %s376 = ssub.s32 %s24, %s31
    %p377 = scmp.eq.s32.totalorder %s376, 0
    %s379 = sadd.s32 %s378, 1
    %s380 = scalar_select %p377, %s378, %s379
    %p383 = pneg %p377
    %p384 = scmp.eq.s32.totalorder %s24, 1
    %p385 = por %p383, %p384
    %p386 = scmp.ne.s32.totalorder %s378, %s381
    %p387 = scmp.eq.s32.totalorder %s24, 0
    %p388 = por %p386, %p387
    %p389 = scmp.ne.s32.totalorder %s378, %s381
    %p390 = scmp.eq.s32.totalorder %s29, 1
    %p391 = por %p389, %p390
    %p392 = scmp.ne.s32.totalorder %s381, %s382
    %p393 = scmp.eq.s32.totalorder %s29, 0
    %p394 = por %p392, %p393
    %p395 = scmp.ne.s32.totalorder %s381, %s382
    %p396 = scmp.eq.s32.totalorder %s30, 1
    %p397 = por %p395, %p396
    %p399 = scmp.ne.s32.totalorder %s382, %s398
    %p400 = scmp.eq.s32.totalorder %s30, 0
    %p401 = por %p399, %p400
    %s402 = ssub.s32 %s24, %s31
    %p403 = scmp.eq.s32.totalorder %s402, 0
    %s405 = sadd.s32 %s404, 1
    %s406 = scalar_select %p403, %s404, %s405
    %p409 = pneg %p403
    %p410 = scmp.eq.s32.totalorder %s24, 1
    %p411 = por %p409, %p410
    %p412 = scmp.ne.s32.totalorder %s404, %s407
    %p413 = scmp.eq.s32.totalorder %s24, 0
    %p414 = por %p412, %p413
    %p415 = scmp.ne.s32.totalorder %s404, %s407
    %p416 = scmp.eq.s32.totalorder %s29, 1
    %p417 = por %p415, %p416
    %p418 = scmp.ne.s32.totalorder %s407, %s408
    %p419 = scmp.eq.s32.totalorder %s29, 0
    %p420 = por %p418, %p419
    %p421 = scmp.ne.s32.totalorder %s407, %s408
    %p422 = scmp.eq.s32.totalorder %s30, 1
    %p423 = por %p421, %p422
    %p425 = scmp.ne.s32.totalorder %s408, %s424
    %p426 = scmp.eq.s32.totalorder %s30, 0
    %p427 = por %p425, %p426
    %s429 = sadd.s32 %s428, 1
    %p432 = scmp.eq.s32.totalorder %s24, 1
    %p433 = scmp.ne.s32.totalorder %s428, %s430
    %p434 = scmp.eq.s32.totalorder %s24, 0
    %p435 = por %p433, %p434
    %p436 = scmp.ne.s32.totalorder %s428, %s430
    %p437 = scmp.eq.s32.totalorder %s29, 1
    %p438 = por %p436, %p437
    %p439 = scmp.ne.s32.totalorder %s430, %s431
    %p440 = scmp.eq.s32.totalorder %s29, 0
    %p441 = por %p439, %p440
    %p442 = scmp.ne.s32.totalorder %s430, %s431
    %p443 = scmp.eq.s32.totalorder %s30, 1
    %p444 = por %p442, %p443
    %p446 = scmp.ne.s32.totalorder %s431, %s445
    %p447 = scmp.eq.s32.totalorder %s30, 0
    %p448 = por %p446, %p447
    %s450 = sadd.s32 %s449, 1
    %p453 = scmp.eq.s32.totalorder %s24, 1
    %p454 = scmp.ne.s32.totalorder %s449, %s451
    %p455 = scmp.eq.s32.totalorder %s24, 0
    %p456 = por %p454, %p455
    %p457 = scmp.ne.s32.totalorder %s449, %s451
    %p458 = scmp.eq.s32.totalorder %s29, 1
    %p459 = por %p457, %p458
    %p460 = scmp.ne.s32.totalorder %s451, %s452
    %p461 = scmp.eq.s32.totalorder %s29, 0
    %p462 = por %p460, %p461
    %p463 = scmp.ne.s32.totalorder %s451, %s452
    %p464 = scmp.eq.s32.totalorder %s30, 1
    %p465 = por %p463, %p464
    %p467 = scmp.ne.s32.totalorder %s452, %s466
    %p468 = scmp.eq.s32.totalorder %s30, 0
    %p469 = por %p467, %p468
    %s471 = sadd.s32 %s470, 1
    %p474 = scmp.eq.s32.totalorder %s24, 1
    %p475 = scmp.ne.s32.totalorder %s470, %s472
    %p476 = scmp.eq.s32.totalorder %s24, 0
    %p477 = por %p475, %p476
    %p478 = scmp.ne.s32.totalorder %s470, %s472
    %p479 = scmp.eq.s32.totalorder %s29, 1
    %p480 = por %p478, %p479
    %p481 = scmp.ne.s32.totalorder %s472, %s473
    %p482 = scmp.eq.s32.totalorder %s29, 0
    %p483 = por %p481, %p482
    %p484 = scmp.ne.s32.totalorder %s472, %s473
    %p485 = scmp.eq.s32.totalorder %s30, 1
    %p486 = por %p484, %p485
    %p488 = scmp.ne.s32.totalorder %s473, %s487
    %p489 = scmp.eq.s32.totalorder %s30, 0
    %p490 = por %p488, %p489
    %p491 = scmp.le.s32.totalorder 1, %s24
    %p492 = scmp.lt.s32.totalorder %s24, 3
    %p493 = pnand %p491, %p492
    %p494 = pneg %p493
    // Predicated region
    $region9: #{vit_encoder_forward.1} parent=5 // pred_check
      _
    $region10: #{vit_encoder_forward.1} parent=5 // pred_check_branch
      %496 = sbr.rel (%p493) target = $region12
    $region11: #{vit_encoder_forward.1} parent=5 // pred_region
      %s497 = ssub.s32 %s24, 1
      // Predicated region
      $region13: #{vit_encoder_forward.1} parent=11 // pred_check
        %p498 = pneg %p45
      $region14: #{vit_encoder_forward.1} parent=11 // pred_check_branch
        %500 = sbr.rel (%p498) target = $region16
      $region15: #{vit_encoder_forward.1} parent=11 // pred_region
        _
      $region16: #{vit_encoder_forward.1} parent=11 // pred_fallthru
        _
      // Predicated region
      $region17: #{vit_encoder_forward.1} parent=11 // pred_check
        %p501 = pneg %p66
      $region18: #{vit_encoder_forward.1} parent=11 // pred_check_branch
        %503 = sbr.rel (%p501) target = $region20
      $region19: #{vit_encoder_forward.1} parent=11 // pred_region
        _
      $region20: #{vit_encoder_forward.1} parent=11 // pred_fallthru
        _
      // Predicated region
      $region21: #{vit_encoder_forward.1} parent=11 // pred_check
        %p504 = pneg %p87
      $region22: #{vit_encoder_forward.1} parent=11 // pred_check_branch
        %506 = sbr.rel (%p504) target = $region24
      $region23: #{vit_encoder_forward.1} parent=11 // pred_region
        _
      $region24: #{vit_encoder_forward.1} parent=11 // pred_fallthru
        _
      // Predicated region
      $region25: #{vit_encoder_forward.1} parent=11 // pred_check
        %p507 = pneg %p108
      $region26: #{vit_encoder_forward.1} parent=11 // pred_check_branch
        %509 = sbr.rel (%p507) target = $region28
      $region27: #{vit_encoder_forward.1} parent=11 // pred_region
        _
      $region28: #{vit_encoder_forward.1} parent=11 // pred_fallthru
        _
      // Predicated region
      $region29: #{vit_encoder_forward.1} parent=11 // pred_check
        %p510 = pneg %p441
      $region30: #{vit_encoder_forward.1} parent=11 // pred_check_branch
        %512 = sbr.rel (%p510) target = $region32
      $region31: #{vit_encoder_forward.1} parent=11 // pred_region
        _
      $region32: #{vit_encoder_forward.1} parent=11 // pred_fallthru
        _
      // Predicated region
      $region33: #{vit_encoder_forward.1} parent=11 // pred_check
        %p513 = pneg %p462
      $region34: #{vit_encoder_forward.1} parent=11 // pred_check_branch
        %515 = sbr.rel (%p513) target = $region36
      $region35: #{vit_encoder_forward.1} parent=11 // pred_region
        _
      $region36: #{vit_encoder_forward.1} parent=11 // pred_fallthru
        _
    $region12: #{vit_encoder_forward.1} parent=5 // pred_fallthru
      _
    %p516 = scmp.lt.s32.totalorder %s24, 2
    // Predicated region
    $region37: #{vit_encoder_forward.1} parent=5 // pred_check
      %p517 = pneg %p516
    $region38: #{vit_encoder_forward.1} parent=5 // pred_check_branch
      %519 = sbr.rel (%p517) target = $region40
    $region39: #{vit_encoder_forward.1} parent=5 // pred_region
      // Predicated region
      $region41: #{vit_encoder_forward.1} parent=39 // pred_check
        %p520 = pneg %p128
      $region42: #{vit_encoder_forward.1} parent=39 // pred_check_branch
        %522 = sbr.rel (%p520) target = $region44
      $region43: #{vit_encoder_forward.1} parent=39 // pred_region
        %p523 = scmp.lt.s32.totalorder %s24, 1
        %s524 = scalar_select %p523, %s24, 1
        %s525 = smul.addr %s524, 4
        %s526 = smul.addr %s525, 8
        %s527 = scalar_lea.vmem %s4, %s526
      $region44: #{vit_encoder_forward.1} parent=39 // pred_fallthru
        _
      // Predicated region
      $region45: #{vit_encoder_forward.1} parent=39 // pred_check
        %p528 = pneg %p154
      $region46: #{vit_encoder_forward.1} parent=39 // pred_check_branch
        %530 = sbr.rel (%p528) target = $region48
      $region47: #{vit_encoder_forward.1} parent=39 // pred_region
        %p531 = scmp.lt.s32.totalorder %s24, 1
        %s532 = scalar_select %p531, %s24, 1
        %s533 = scalar_lea.vmem %s5, %s532
      $region48: #{vit_encoder_forward.1} parent=39 // pred_fallthru
        _
      // Predicated region
      $region49: #{vit_encoder_forward.1} parent=39 // pred_check
        %p534 = pneg %p180
      $region50: #{vit_encoder_forward.1} parent=39 // pred_check_branch
        %536 = sbr.rel (%p534) target = $region52
      $region51: #{vit_encoder_forward.1} parent=39 // pred_region
        %p537 = scmp.lt.s32.totalorder %s24, 1
        %s538 = scalar_select %p537, %s24, 1
        %s539 = smul.addr %s538, 4
        %s540 = smul.addr %s539, 8
        %s541 = scalar_lea.vmem %s6, %s540
      $region52: #{vit_encoder_forward.1} parent=39 // pred_fallthru
        _
      // Predicated region
      $region53: #{vit_encoder_forward.1} parent=39 // pred_check
        %p542 = pneg %p206
      $region54: #{vit_encoder_forward.1} parent=39 // pred_check_branch
        %544 = sbr.rel (%p542) target = $region56
      $region55: #{vit_encoder_forward.1} parent=39 // pred_region
        %p545 = scmp.lt.s32.totalorder %s24, 1
        %s546 = scalar_select %p545, %s24, 1
        %s547 = scalar_lea.vmem %s7, %s546
      $region56: #{vit_encoder_forward.1} parent=39 // pred_fallthru
        _
      // Predicated region
      $region57: #{vit_encoder_forward.1} parent=39 // pred_check
        %p548 = pneg %p232
      $region58: #{vit_encoder_forward.1} parent=39 // pred_check_branch
        %550 = sbr.rel (%p548) target = $region60
      $region59: #{vit_encoder_forward.1} parent=39 // pred_region
        %p551 = scmp.lt.s32.totalorder %s24, 1
        %s552 = scalar_select %p551, %s24, 1
        %s553 = scalar_lea.vmem %s8, %s552
      $region60: #{vit_encoder_forward.1} parent=39 // pred_fallthru
        _
      // Predicated region
      $region61: #{vit_encoder_forward.1} parent=39 // pred_check
        %p554 = pneg %p258
      $region62: #{vit_encoder_forward.1} parent=39 // pred_check_branch
        %556 = sbr.rel (%p554) target = $region64
      $region63: #{vit_encoder_forward.1} parent=39 // pred_region
        %p557 = scmp.lt.s32.totalorder %s24, 1
        %s558 = scalar_select %p557, %s24, 1
        %s559 = scalar_lea.vmem %s9, %s558
      $region64: #{vit_encoder_forward.1} parent=39 // pred_fallthru
        _
      // Predicated region
      $region65: #{vit_encoder_forward.1} parent=39 // pred_check
        %p560 = pneg %p284
      $region66: #{vit_encoder_forward.1} parent=39 // pred_check_branch
        %562 = sbr.rel (%p560) target = $region68
      $region67: #{vit_encoder_forward.1} parent=39 // pred_region
        %p563 = scmp.lt.s32.totalorder %s24, 1
        %s564 = scalar_select %p563, %s24, 1
        %s565 = scalar_lea.vmem %s10, %s564
      $region68: #{vit_encoder_forward.1} parent=39 // pred_fallthru
        _
      // Predicated region
      $region69: #{vit_encoder_forward.1} parent=39 // pred_check
        %p566 = pneg %p310
      $region70: #{vit_encoder_forward.1} parent=39 // pred_check_branch
        %568 = sbr.rel (%p566) target = $region72
      $region71: #{vit_encoder_forward.1} parent=39 // pred_region
        %p569 = scmp.lt.s32.totalorder %s24, 1
        %s570 = scalar_select %p569, %s24, 1
        %s571 = scalar_lea.vmem %s11, %s570
      $region72: #{vit_encoder_forward.1} parent=39 // pred_fallthru
        _
      // Predicated region
      $region73: #{vit_encoder_forward.1} parent=39 // pred_check
        %p572 = pneg %p336
      $region74: #{vit_encoder_forward.1} parent=39 // pred_check_branch
        %574 = sbr.rel (%p572) target = $region76
      $region75: #{vit_encoder_forward.1} parent=39 // pred_region
        %p575 = scmp.lt.s32.totalorder %s24, 1
        %s576 = scalar_select %p575, %s24, 1
        %s577 = smul.addr %s576, 4
        %s578 = smul.addr %s577, 8
        %s579 = scalar_lea.vmem %s12, %s578
      $region76: #{vit_encoder_forward.1} parent=39 // pred_fallthru
        _
      // Predicated region
      $region77: #{vit_encoder_forward.1} parent=39 // pred_check
        %p580 = pneg %p362
      $region78: #{vit_encoder_forward.1} parent=39 // pred_check_branch
        %582 = sbr.rel (%p580) target = $region80
      $region79: #{vit_encoder_forward.1} parent=39 // pred_region
        %p583 = scmp.lt.s32.totalorder %s24, 1
        %s584 = scalar_select %p583, %s24, 1
        %s585 = scalar_lea.vmem %s13, %s584
      $region80: #{vit_encoder_forward.1} parent=39 // pred_fallthru
        _
      // Predicated region
      $region81: #{vit_encoder_forward.1} parent=39 // pred_check
        %p586 = pneg %p388
      $region82: #{vit_encoder_forward.1} parent=39 // pred_check_branch
        %588 = sbr.rel (%p586) target = $region84
      $region83: #{vit_encoder_forward.1} parent=39 // pred_region
        %p589 = scmp.lt.s32.totalorder %s24, 1
        %s590 = scalar_select %p589, %s24, 1
        %s591 = smul.addr %s590, 16
        %s592 = smul.addr %s591, 8
        %s593 = scalar_lea.vmem %s14, %s592
      $region84: #{vit_encoder_forward.1} parent=39 // pred_fallthru
        _
      // Predicated region
      $region85: #{vit_encoder_forward.1} parent=39 // pred_check
        %p594 = pneg %p414
      $region86: #{vit_encoder_forward.1} parent=39 // pred_check_branch
        %596 = sbr.rel (%p594) target = $region88
      $region87: #{vit_encoder_forward.1} parent=39 // pred_region
        %p597 = scmp.lt.s32.totalorder %s24, 1
        %s598 = scalar_select %p597, %s24, 1
        %s599 = scalar_lea.vmem %s15, %s598
      $region88: #{vit_encoder_forward.1} parent=39 // pred_fallthru
        _
    $region40: #{vit_encoder_forward.1} parent=5 // pred_fallthru
      _
    %p600 = scmp.le.s32.totalorder 1, %s24
    %p601 = scmp.lt.s32.totalorder %s24, 3
    %p602 = pnand %p600, %p601
    %p603 = pneg %p602
    // Predicated region
    $region89: #{vit_encoder_forward.1} parent=5 // pred_check
      _
    $region90: #{vit_encoder_forward.1} parent=5 // pred_check_branch
      %605 = sbr.rel (%p602) target = $region92
    $region91: #{vit_encoder_forward.1} parent=5 // pred_region
      %s606 = ssub.s32 %s24, 1
      %p607 = pneg %p45
      %p608 = pneg %p42
      %p609 = pneg %p66
      %p610 = pneg %p63
      %p611 = pneg %p87
      %p612 = pneg %p84
      %p613 = pneg %p108
      %p614 = pneg %p105
      %p615 = scmp.lt.s32.totalorder %s29, 1
      %s616 = scalar_select %p615, %s29, 1
      %s617 = smul.addr %s616, 4
      %s618 = smul.addr %s617, 8
      %s619 = scalar_lea.vmem %s4, %s618
      %p620 = pneg %p134
      %p621 = pneg %p131
      %p622 = scmp.lt.s32.totalorder %s29, 1
      %s623 = scalar_select %p622, %s29, 1
      %s624 = scalar_lea.vmem %s5, %s623
      %p625 = pneg %p160
      %p626 = pneg %p157
      %p627 = scmp.lt.s32.totalorder %s29, 1
      %s628 = scalar_select %p627, %s29, 1
      %s629 = smul.addr %s628, 4
      %s630 = smul.addr %s629, 8
      %s631 = scalar_lea.vmem %s6, %s630
      %p632 = pneg %p186
      %p633 = pneg %p183
      %p634 = scmp.lt.s32.totalorder %s29, 1
      %s635 = scalar_select %p634, %s29, 1
      %s636 = scalar_lea.vmem %s7, %s635
      %p637 = pneg %p212
      %p638 = pneg %p209
      %p639 = scmp.lt.s32.totalorder %s29, 1
      %s640 = scalar_select %p639, %s29, 1
      %s641 = scalar_lea.vmem %s8, %s640
      %p642 = pneg %p238
      %p643 = pneg %p235
      %p644 = scmp.lt.s32.totalorder %s29, 1
      %s645 = scalar_select %p644, %s29, 1
      %s646 = scalar_lea.vmem %s9, %s645
      %p647 = pneg %p264
      %p648 = pneg %p261
      %p649 = scmp.lt.s32.totalorder %s29, 1
      %s650 = scalar_select %p649, %s29, 1
      %s651 = scalar_lea.vmem %s10, %s650
      %p652 = pneg %p290
      %p653 = pneg %p287
      %p654 = scmp.lt.s32.totalorder %s29, 1
      %s655 = scalar_select %p654, %s29, 1
      %s656 = scalar_lea.vmem %s11, %s655
      %p657 = pneg %p316
      %p658 = pneg %p313
      %p659 = scmp.lt.s32.totalorder %s29, 1
      %s660 = scalar_select %p659, %s29, 1
      %s661 = smul.addr %s660, 4
      %s662 = smul.addr %s661, 8
      %s663 = scalar_lea.vmem %s12, %s662
      %p664 = pneg %p342
      %p665 = pneg %p339
      %p666 = scmp.lt.s32.totalorder %s29, 1
      %s667 = scalar_select %p666, %s29, 1
      %s668 = scalar_lea.vmem %s13, %s667
      %p669 = pneg %p368
      %p670 = pneg %p365
      %p671 = scmp.lt.s32.totalorder %s29, 1
      %s672 = scalar_select %p671, %s29, 1
      %s673 = smul.addr %s672, 16
      %s674 = smul.addr %s673, 8
      %s675 = scalar_lea.vmem %s14, %s674
      %p676 = pneg %p394
      %p677 = pneg %p391
      %p678 = scmp.lt.s32.totalorder %s29, 1
      %s679 = scalar_select %p678, %s29, 1
      %s680 = scalar_lea.vmem %s15, %s679
      %p681 = pneg %p420
      %p682 = pneg %p417
      %p683 = pneg %p441
      %p684 = pneg %p438
      %p685 = pneg %p462
      %p686 = pneg %p459
      %p687 = pneg %p483
      %p688 = pneg %p480
      %p689 = scmp.lt.s32.totalorder %s29, 1
      %s690 = scalar_select %p689, %s29, 1
      %s691 = smul.addr %s690, 4
      %s692 = smul.addr %s691, 8
      %s693 = scalar_lea.vmem %s4, %s692
      %p694 = scmp.lt.s32.totalorder %s29, 1
      %s695 = scalar_select %p694, %s29, 1
      %s696 = scalar_lea.vmem %s5, %s695
      %p697 = scmp.lt.s32.totalorder %s29, 1
      %s698 = scalar_select %p697, %s29, 1
      %s699 = smul.addr %s698, 4
      %s700 = smul.addr %s699, 8
      %s701 = scalar_lea.vmem %s6, %s700
      %p702 = scmp.lt.s32.totalorder %s29, 1
      %s703 = scalar_select %p702, %s29, 1
      %s704 = scalar_lea.vmem %s7, %s703
      %p705 = scmp.lt.s32.totalorder %s29, 1
      %s706 = scalar_select %p705, %s29, 1
      %s707 = scalar_lea.vmem %s8, %s706
      %p708 = scmp.lt.s32.totalorder %s29, 1
      %s709 = scalar_select %p708, %s29, 1
      %s710 = scalar_lea.vmem %s9, %s709
      %p711 = scmp.lt.s32.totalorder %s29, 1
      %s712 = scalar_select %p711, %s29, 1
      %s713 = scalar_lea.vmem %s10, %s712
      %p714 = scmp.lt.s32.totalorder %s29, 1
      %s715 = scalar_select %p714, %s29, 1
      %s716 = scalar_lea.vmem %s11, %s715
      %p717 = scmp.lt.s32.totalorder %s29, 1
      %s718 = scalar_select %p717, %s29, 1
      %s719 = smul.addr %s718, 4
      %s720 = smul.addr %s719, 8
      %s721 = scalar_lea.vmem %s12, %s720
      %p722 = scmp.lt.s32.totalorder %s29, 1
      %s723 = scalar_select %p722, %s29, 1
      %s724 = scalar_lea.vmem %s13, %s723
      %p725 = scmp.lt.s32.totalorder %s29, 1
      %s726 = scalar_select %p725, %s29, 1
      %s727 = smul.addr %s726, 16
      %s728 = smul.addr %s727, 8
      %s729 = scalar_lea.vmem %s14, %s728
      %p730 = scmp.lt.s32.totalorder %s29, 1
      %s731 = scalar_select %p730, %s29, 1
      %s732 = scalar_lea.vmem %s15, %s731
      %p733 = scmp.eq.s32.totalorder %s29, 0
      // Predicated region
      $region93: #{vit_encoder_forward.1} parent=91 // pred_check
        %p734 = pneg %p733
      $region94: #{vit_encoder_forward.1} parent=91 // pred_check_branch
        %736 = sbr.rel (%p734) target = $region96
      $region95: #{vit_encoder_forward.1} parent=91 // pred_region
        %v737 = vld [vmem:[%s2] sm:$0xff]
        %v738 = vld [vmem:[%s2 + $0x8] sm:$0xff]
        %v739 = vld [vmem:[%s0] sm:$0xff]
        %v740 = vld [vmem:[%s0 + $0x8] sm:$0xff]
        %v741 = vld [vmem:[%s0 + $0x10] sm:$0xff]
        %v742 = vld [vmem:[%s0 + $0x18] sm:$0xff]
        %v743 = vld [vmem:[%s0 + $0x20] sm:$0xff]
        %v744 = vld [vmem:[%s0 + $0x28] sm:$0xff]
        %v745 = vld [vmem:[%s0 + $0x30] sm:$0xff]
        %v746 = vld [vmem:[%s0 + $0x38] sm:$0xff]
        %v747 = vld [vmem:[%s0 + $0x40] sm:$0xff]
        %v748 = vld [vmem:[%s0 + $0x48] sm:$0xff]
        %v749 = vld [vmem:[%s0 + $0x50] sm:$0xff]
        %v750 = vld [vmem:[%s0 + $0x58] sm:$0xff]
        %v751 = vld [vmem:[%s1] sm:$0xff]
        %v752 = vld [vmem:[%s1 + $0x8] sm:$0xff]
        %v753 = vld [vmem:[%s1 + $0x10] sm:$0xff]
        %v754 = vld [vmem:[%s1 + $0x18] sm:$0xff]
        %v755 = vld [vmem:[%s1 + $0x20] sm:$0xff]
        %v756 = vld [vmem:[%s1 + $0x28] sm:$0xff]
        %v757 = vld [vmem:[%s1 + $0x30] sm:$0xff]
        %v758 = vld [vmem:[%s1 + $0x38] sm:$0xff]
        %v759 = vld [vmem:[%s1 + $0x40] sm:$0xff]
        %v760 = vld [vmem:[%s1 + $0x48] sm:$0xff]
        %v761 = vld [vmem:[%s1 + $0x50] sm:$0xff]
        %v762 = vld [vmem:[%s1 + $0x58] sm:$0xff]
        %v763 = vld [vmem:[%s1 + $0x60] sm:$0xff]
        %v764 = vld [vmem:[%s1 + $0x68] sm:$0xff]
        %v765 = vld [vmem:[%s1 + $0x70] sm:$0xff]
        %v766 = vld [vmem:[%s1 + $0x78] sm:$0xff]
        %v767 = vld [vmem:[%s1 + $0x80] sm:$0xff]
        %v768 = vld [vmem:[%s1 + $0x88] sm:$0xff]
        %v769 = vld [vmem:[%s1 + $0x90] sm:$0xff]
        %v770 = vld [vmem:[%s1 + $0x98] sm:$0xff]
        %v771 = vld [vmem:[%s1 + $0xa0] sm:$0xff]
        %v772 = vld [vmem:[%s1 + $0xa8] sm:$0xff]
        %v773 = vld [vmem:[%s1 + $0xb0] sm:$0xff]
        %v774 = vld [vmem:[%s1 + $0xb8] sm:$0xff]
        %v775 = vld [vmem:[%s1 + $0xc0] sm:$0xff]
        %v776 = vld [vmem:[%s1 + $0xc8] sm:$0xff]
        %v777 = vld [vmem:[%s1 + $0xd0] sm:$0xff]
        %v778 = vld [vmem:[%s1 + $0xd8] sm:$0xff]
        %v779 = vld [vmem:[%s1 + $0xe0] sm:$0xff]
        %v780 = vld [vmem:[%s1 + $0xe8] sm:$0xff]
        %v781 = vld [vmem:[%s1 + $0xf0] sm:$0xff]
        %v782 = vld [vmem:[%s1 + $0xf8] sm:$0xff]
        %v783 = vld [vmem:[%s1 + $0x100] sm:$0xff]
        %v784 = vld [vmem:[%s1 + $0x108] sm:$0xff]
        %v785 = vld [vmem:[%s1 + $0x110] sm:$0xff]
        %v786 = vld [vmem:[%s1 + $0x118] sm:$0xff]
        %v787 = vld [vmem:[%s1 + $0x120] sm:$0xff]
        %v788 = vld [vmem:[%s1 + $0x128] sm:$0xff]
        %v789 = vld [vmem:[%s1 + $0x130] sm:$0xff]
        %v790 = vld [vmem:[%s1 + $0x138] sm:$0xff]
        %v791 = vld [vmem:[%s1 + $0x140] sm:$0xff]
        %v792 = vld [vmem:[%s1 + $0x148] sm:$0xff]
        %v793 = vld [vmem:[%s1 + $0x150] sm:$0xff]
        %v794 = vld [vmem:[%s1 + $0x158] sm:$0xff]
        %v795 = vld [vmem:[%s1 + $0x160] sm:$0xff]
        %v796 = vld [vmem:[%s1 + $0x168] sm:$0xff]
        %v797 = vld [vmem:[%s1 + $0x170] sm:$0xff]
        %v798 = vld [vmem:[%s1 + $0x178] sm:$0xff]
        %v799 = vld [vmem:[%s1 + $0x180] sm:$0xff]
        %v800 = vld [vmem:[%s1 + $0x188] sm:$0xff]
        %v801 = vld [vmem:[%s1 + $0x190] sm:$0xff]
        %v802 = vld [vmem:[%s1 + $0x198] sm:$0xff]
        %v803 = vld [vmem:[%s1 + $0x1a0] sm:$0xff]
        %v804 = vld [vmem:[%s1 + $0x1a8] sm:$0xff]
        %v805 = vld [vmem:[%s1 + $0x1b0] sm:$0xff]
        %v806 = vld [vmem:[%s1 + $0x1b8] sm:$0xff]
        %v807 = vld [vmem:[%s1 + $0x1c0] sm:$0xff]
        %v808 = vld [vmem:[%s1 + $0x1c8] sm:$0xff]
        %v809 = vld [vmem:[%s1 + $0x1d0] sm:$0xff]
        %v810 = vld [vmem:[%s1 + $0x1d8] sm:$0xff]
        %v811 = vld [vmem:[%s1 + $0x1e0] sm:$0xff]
        %v812 = vld [vmem:[%s1 + $0x1e8] sm:$0xff]
        %v813 = vld [vmem:[%s1 + $0x1f0] sm:$0xff]
        %v814 = vld [vmem:[%s1 + $0x1f8] sm:$0xff]
        %v815 = vld [vmem:[%s1 + $0x200] sm:$0xff]
        %v816 = vld [vmem:[%s1 + $0x208] sm:$0xff]
        %v817 = vld [vmem:[%s1 + $0x210] sm:$0xff]
        %v818 = vld [vmem:[%s1 + $0x218] sm:$0xff]
        %v819 = vld [vmem:[%s1 + $0x220] sm:$0xff]
        %v820 = vld [vmem:[%s1 + $0x228] sm:$0xff]
        %v821 = vld [vmem:[%s1 + $0x230] sm:$0xff]
        %v822 = vld [vmem:[%s1 + $0x238] sm:$0xff]
        %v823 = vld [vmem:[%s1 + $0x240] sm:$0xff]
        %v824 = vld [vmem:[%s1 + $0x248] sm:$0xff]
        %v825 = vld [vmem:[%s1 + $0x250] sm:$0xff]
        %v826 = vld [vmem:[%s1 + $0x258] sm:$0xff]
        %v827 = vld [vmem:[%s1 + $0x260] sm:$0xff]
        %v828 = vld [vmem:[%s1 + $0x268] sm:$0xff]
        %v829 = vld [vmem:[%s1 + $0x270] sm:$0xff]
        %v830 = vld [vmem:[%s1 + $0x278] sm:$0xff]
        %v831 = vld [vmem:[%s1 + $0x280] sm:$0xff]
        %v832 = vld [vmem:[%s1 + $0x288] sm:$0xff]
        %v833 = vld [vmem:[%s1 + $0x290] sm:$0xff]
        %v834 = vld [vmem:[%s1 + $0x298] sm:$0xff]
        %v835 = vld [vmem:[%s1 + $0x2a0] sm:$0xff]
        %v836 = vld [vmem:[%s1 + $0x2a8] sm:$0xff]
        %v837 = vld [vmem:[%s1 + $0x2b0] sm:$0xff]
        %v838 = vld [vmem:[%s1 + $0x2b8] sm:$0xff]
        %v839 = vld [vmem:[%s1 + $0x2c0] sm:$0xff]
        %v840 = vld [vmem:[%s1 + $0x2c8] sm:$0xff]
        %v841 = vld [vmem:[%s1 + $0x2d0] sm:$0xff]
        %v842 = vld [vmem:[%s1 + $0x2d8] sm:$0xff]
        %v843 = vld [vmem:[%s1 + $0x2e0] sm:$0xff]
        %v844 = vld [vmem:[%s1 + $0x2e8] sm:$0xff]
        %v845 = vld [vmem:[%s1 + $0x2f0] sm:$0xff]
        %v846 = vld [vmem:[%s1 + $0x2f8] sm:$0xff]
        %847 = vmatpush.msra.mxu0 %v766
        %848 = vmatpush.msra.mxu0 %v765
        %849 = vmatpush.msra.mxu0 %v764
        %850 = vmatpush.msra.mxu0 %v763
        %851 = vmatpush.msra.mxu0 %v762
        %852 = vmatpush.msra.mxu0 %v761
        %853 = vmatpush.msra.mxu0 %v760
        %854 = vmatpush.msra.mxu0 %v759
        %855 = vmatpush.msra.mxu0 %v758
        %856 = vmatpush.msra.mxu0 %v757
        %857 = vmatpush.msra.mxu0 %v756
        %858 = vmatpush.msra.mxu0 %v755
        %859 = vmatpush.msra.mxu0 %v754
        %860 = vmatpush.msra.mxu0 %v753
        %861 = vmatpush.msra.mxu0 %v752
        %862 = vmatpush.msra.mxu0 %v751
        %863 = vmatmul.f32.gmra.mxu0 %v739
        %v864 = vpop.f32.mrf.mxu0
        %v865 = vadd.f32 0.0, %v864
        %866 = vmatmul.f32.gmra.mxu0 %v745
        %v867 = vpop.f32.mrf.mxu0
        %v868 = vadd.f32 0.0, %v867
        %869 = vdwg.mxu0
        %870 = vmatpush.msra.mxu0 %v782
        %871 = vmatpush.msra.mxu0 %v781
        %872 = vmatpush.msra.mxu0 %v780
        %873 = vmatpush.msra.mxu0 %v779
        %874 = vmatpush.msra.mxu0 %v778
        %875 = vmatpush.msra.mxu0 %v777
        %876 = vmatpush.msra.mxu0 %v776
        %877 = vmatpush.msra.mxu0 %v775
        %878 = vmatpush.msra.mxu0 %v774
        %879 = vmatpush.msra.mxu0 %v773
        %880 = vmatpush.msra.mxu0 %v772
        %881 = vmatpush.msra.mxu0 %v771
        %882 = vmatpush.msra.mxu0 %v770
        %883 = vmatpush.msra.mxu0 %v769
        %884 = vmatpush.msra.mxu0 %v768
        %885 = vmatpush.msra.mxu0 %v767
        %886 = vmatmul.f32.gmra.mxu0 %v740
        %v887 = vpop.f32.mrf.mxu0
        %v888 = vadd.f32 %v865, %v887
        %889 = vmatmul.f32.gmra.mxu0 %v746
        %v890 = vpop.f32.mrf.mxu0
        %v891 = vadd.f32 %v868, %v890
        %892 = vdwg.mxu0
        %893 = vmatpush.msra.mxu0 %v798
        %894 = vmatpush.msra.mxu0 %v797
        %895 = vmatpush.msra.mxu0 %v796
        %896 = vmatpush.msra.mxu0 %v795
        %897 = vmatpush.msra.mxu0 %v794
        %898 = vmatpush.msra.mxu0 %v793
        %899 = vmatpush.msra.mxu0 %v792
        %900 = vmatpush.msra.mxu0 %v791
        %901 = vmatpush.msra.mxu0 %v790
        %902 = vmatpush.msra.mxu0 %v789
        %903 = vmatpush.msra.mxu0 %v788
        %904 = vmatpush.msra.mxu0 %v787
        %905 = vmatpush.msra.mxu0 %v786
        %906 = vmatpush.msra.mxu0 %v785
        %907 = vmatpush.msra.mxu0 %v784
        %908 = vmatpush.msra.mxu0 %v783
        %909 = vmatmul.f32.gmra.mxu0 %v741
        %v910 = vpop.f32.mrf.mxu0
        %v911 = vadd.f32 %v888, %v910
        %912 = vmatmul.f32.gmra.mxu0 %v747
        %v913 = vpop.f32.mrf.mxu0
        %v914 = vadd.f32 %v891, %v913
        %915 = vdwg.mxu0
        %916 = vmatpush.msra.mxu0 %v814
        %917 = vmatpush.msra.mxu0 %v813
        %918 = vmatpush.msra.mxu0 %v812
        %919 = vmatpush.msra.mxu0 %v811
        %920 = vmatpush.msra.mxu0 %v810
        %921 = vmatpush.msra.mxu0 %v809
        %922 = vmatpush.msra.mxu0 %v808
        %923 = vmatpush.msra.mxu0 %v807
        %924 = vmatpush.msra.mxu0 %v806
        %925 = vmatpush.msra.mxu0 %v805
        %926 = vmatpush.msra.mxu0 %v804
        %927 = vmatpush.msra.mxu0 %v803
        %928 = vmatpush.msra.mxu0 %v802
        %929 = vmatpush.msra.mxu0 %v801
        %930 = vmatpush.msra.mxu0 %v800
        %931 = vmatpush.msra.mxu0 %v799
        %932 = vmatmul.f32.gmra.mxu0 %v742
        %v933 = vpop.f32.mrf.mxu0
        %v934 = vadd.f32 %v911, %v933
        %935 = vmatmul.f32.gmra.mxu0 %v748
        %v936 = vpop.f32.mrf.mxu0
        %v937 = vadd.f32 %v914, %v936
        %938 = vdwg.mxu0
        %939 = vmatpush.msra.mxu0 %v830
        %940 = vmatpush.msra.mxu0 %v829
        %941 = vmatpush.msra.mxu0 %v828
        %942 = vmatpush.msra.mxu0 %v827
        %943 = vmatpush.msra.mxu0 %v826
        %944 = vmatpush.msra.mxu0 %v825
        %945 = vmatpush.msra.mxu0 %v824
        %946 = vmatpush.msra.mxu0 %v823
        %947 = vmatpush.msra.mxu0 %v822
        %948 = vmatpush.msra.mxu0 %v821
        %949 = vmatpush.msra.mxu0 %v820
        %950 = vmatpush.msra.mxu0 %v819
        %951 = vmatpush.msra.mxu0 %v818
        %952 = vmatpush.msra.mxu0 %v817
        %953 = vmatpush.msra.mxu0 %v816
        %954 = vmatpush.msra.mxu0 %v815
        %955 = vmatmul.f32.gmra.mxu0 %v743
        %v956 = vpop.f32.mrf.mxu0
        %v957 = vadd.f32 %v934, %v956
        %958 = vmatmul.f32.gmra.mxu0 %v749
        %v959 = vpop.f32.mrf.mxu0
        %v960 = vadd.f32 %v937, %v959
        %961 = vdwg.mxu0
        %962 = vmatpush.msra.mxu0 %v846
        %963 = vmatpush.msra.mxu0 %v845
        %964 = vmatpush.msra.mxu0 %v844
        %965 = vmatpush.msra.mxu0 %v843
        %966 = vmatpush.msra.mxu0 %v842
        %967 = vmatpush.msra.mxu0 %v841
        %968 = vmatpush.msra.mxu0 %v840
        %969 = vmatpush.msra.mxu0 %v839
        %970 = vmatpush.msra.mxu0 %v838
        %971 = vmatpush.msra.mxu0 %v837
        %972 = vmatpush.msra.mxu0 %v836
        %973 = vmatpush.msra.mxu0 %v835
        %974 = vmatpush.msra.mxu0 %v834
        %975 = vmatpush.msra.mxu0 %v833
        %976 = vmatpush.msra.mxu0 %v832
        %977 = vmatpush.msra.mxu0 %v831
        %978 = vmatmul.f32.gmra.mxu0 %v744
        %v979 = vpop.f32.mrf.mxu0
        %v980 = vadd.f32 %v957, %v979
        %981 = vmatmul.f32.gmra.mxu0 %v750
        %v982 = vpop.f32.mrf.mxu0
        %v983 = vadd.f32 %v960, %v982
        %984 = vdwg.mxu0
        %v985 = vadd.f32 %v737, %v980
        %v986 = vadd.f32 %v738, %v983
        %vm987 = vcmask 261120
        %988 = vst.msk [vmem:[#allocation2] sm:$0xff] %vm987, %v985
        %989 = vst.msk [vmem:[#allocation2 + $0x8] sm:$0xff] %vm987, %v986
      $region96: #{vit_encoder_forward.1} parent=91 // pred_fallthru
        _
      %v990 = vld [vmem:[#allocation2] sm:$0xff]
      %v991 = vld [vmem:[#allocation2 + $0x8] sm:$0xff]
      %v992 = vld [vmem:[%s3] sm:$0xff]
      %v993 = vld [vmem:[%s3 + $0x8] sm:$0xff]
      %v994 = vld [vmem:[%s707] sm:$0x1]
      %v995 = vld [vmem:[%s710] sm:$0x1]
      %vm996 = vcmask 261120
      %v997 = vsel %vm996, %v990, 0.0
      %998 = vadd.xlane.f32.xlu0 %v997
      %v999 = vpop.xlane.xlu0 %998
      %v1000 = vsel %vm996, %v991, 0.0
      %1001 = vadd.xlane.f32.xlu0 %v1000
      %v1002 = vpop.xlane.xlu0 %1001
      %v1003 = vrcp.pop 32.0
      %v1004 = vmul.f32 32.0, %v1003
      %v1005 = vsub.f32 1.0, %v1004
      %v1006 = vmul.f32 %v1003, %v1005
      %v1007 = vadd.f32 %v1003, %v1006
      %vm1008 = vweird.f32 %v1003
      %v1009 = vsel %vm1008, %v1003, %v1007
      %v1010 = vmul.f32 %v999, %v1009
      %v1011 = vmul.f32 %v1002, %v1009
      %v1012 = vsub.f32 %v990, %v1010
      %v1013 = vsub.f32 %v991, %v1011
      %v1014 = vmul.f32 %v1012, %v1012
      %v1015 = vmul.f32 %v1013, %v1013
      %v1016 = vsel %vm996, %v1014, 0.0
      %1017 = vadd.xlane.f32.xlu0 %v1016
      %v1018 = vpop.xlane.xlu0 %1017
      %v1019 = vsel %vm996, %v1015, 0.0
      %1020 = vadd.xlane.f32.xlu0 %v1019
      %v1021 = vpop.xlane.xlu0 %1020
      %v1022 = vmul.f32 %v1018, %v1009
      %v1023 = vmul.f32 %v1021, %v1009
      %v1024 = vadd.f32 %v1022, 1e-12
      %v1025 = vadd.f32 %v1023, 1e-12
      %v1026 = vrsqrt.pop %v1024
      %v1027 = vmul.f32 %v1026, %v1024
      %v1028 = vmul.f32 %v1027, %v1026
      %v1029 = vmul.f32 0.5, %v1028
      %v1030 = vsub.f32 1.5, %v1029
      %v1031 = vmul.f32 %v1026, %v1030
      %vm1032 = vweird.f32 %v1024
      %vm1033 = vweird.f32 %v1026
      %vm1034 = vmor %vm1032, %vm1033
      %v1035 = vsel %vm1034, %v1026, %v1031
      %v1036 = vrsqrt.pop %v1025
      %v1037 = vmul.f32 %v1036, %v1025
      %v1038 = vmul.f32 %v1037, %v1036
      %v1039 = vmul.f32 0.5, %v1038
      %v1040 = vsub.f32 1.5, %v1039
      %v1041 = vmul.f32 %v1036, %v1040
      %vm1042 = vweird.f32 %v1025
      %vm1043 = vweird.f32 %v1036
      %vm1044 = vmor %vm1042, %vm1043
      %v1045 = vsel %vm1044, %v1036, %v1041
      %v1046 = vmul.f32 %v1012, %v1035
      %v1047 = vmul.f32 %v1013, %v1045
      %v1049 = vperm.slane %v994, 0
      %v1051 = vmul.f32 %v1046, %v1049
      %v1052 = vmul.f32 %v1047, %v1049
      %v1054 = vperm.slane %v995, 0
      %v1056 = vadd.f32 %v1051, %v1054
      %v1057 = vadd.f32 %v1052, %v1054
      %v1058 = vld [vmem:[%s693] sm:$0xff]
      %v1059 = vld [vmem:[%s693 + $0x8] sm:$0xff]
      %v1060 = vld [vmem:[%s693 + $0x10] sm:$0xff]
      %v1061 = vld [vmem:[%s693 + $0x18] sm:$0xff]
      %v1062 = vld [vmem:[%s696] sm:$0x1]
      %v1064 = vperm.slane %v1062, 0
      %v1067 = vsel %vm996, %v1056, 0
      %v1070 = vsel %vm996, %v1057, 0
      %1072 = vmatpush.msra.mxu0 0.0
      %1073 = vmatpush.msra.mxu0 0.0
      %1074 = vmatpush.msra.mxu0 0.0
      %1075 = vmatpush.msra.mxu0 0.0
      %1076 = vmatpush.msra.mxu0 0.0
      %1077 = vmatpush.msra.mxu0 0.0
      %1078 = vmatpush.msra.mxu0 0.0
      %1079 = vmatpush.msra.mxu0 0.0
      %1080 = vmatpush.msra.mxu0 0.0
      %1081 = vmatpush.msra.mxu0 0.0
      %1082 = vmatpush.msra.mxu0 0.0
      %1083 = vmatpush.msra.mxu0 0.0
      %1084 = vmatpush.msra.mxu0 %v1061
      %1085 = vmatpush.msra.mxu0 %v1060
      %1086 = vmatpush.msra.mxu0 %v1059
      %1087 = vmatpush.msra.mxu0 %v1058
      %1088 = vmatmul.f32.gmra.mxu0 %v1067
      %v1089 = vpop.f32.mrf.mxu0
      %v1090 = vadd.f32 %v1064, %v1089
      %1091 = vmatmul.f32.gmra.mxu0 %v1070
      %v1092 = vpop.f32.mrf.mxu0
      %v1093 = vadd.f32 %v1064, %v1092
      %1094 = vdwg.mxu0
      %vm1095 = vcmask 785408
      %1096 = vst.msk [vmem:[#allocation3] sm:$0xff] %vm1095, %v1090
      %1097 = vst.msk [vmem:[#allocation3 + $0x8] sm:$0xff] %vm1095, %v1093
      %v1098 = vld [vmem:[#allocation3] sm:$0xff]
      %v1099 = vld [vmem:[#allocation3 + $0x8] sm:$0xff]
      %1102 = vrot.lane.b32.xlu0 %v1098, 96
      %v1103 = vpop.permute.xlu0 %1102
      %1104 = vrot.lane.b32.xlu0 %v1099, 96
      %v1105 = vpop.permute.xlu0 %1104
      %vm1106 = vcmask 64512
      %v1107 = vsel %vm1106, %v1098, 0
      %v1109 = vsel %vm1106, %v1099, 0
      %v1111 = vsel %vm1106, %v1103, 0
      %v1113 = vsel %vm1106, %v1105, 0
      %1115 = vmatpush.xpose.msra.mxu0 0.0
      %1116 = vmatpush.xpose.msra.mxu0 0.0
      %1117 = vmatpush.xpose.msra.mxu0 0.0
      %1118 = vmatpush.xpose.msra.mxu0 0.0
      %1119 = vmatpush.xpose.msra.mxu0 0.0
      %1120 = vmatpush.xpose.msra.mxu0 0.0
      %1121 = vmatpush.xpose.msra.mxu0 0.0
      %1122 = vmatpush.xpose.msra.mxu0 0.0
      %1123 = vmatpush.xpose.msra.mxu0 0.0
      %1124 = vmatpush.xpose.msra.mxu0 0.0
      %1125 = vmatpush.xpose.msra.mxu0 0.0
      %1126 = vmatpush.xpose.msra.mxu0 0.0
      %1127 = vmatpush.xpose.msra.mxu0 0.0
      %1128 = vmatpush.xpose.msra.mxu0 0.0
      %1129 = vmatpush.xpose.msra.mxu0 %v1113
      %1130 = vmatpush.xpose.msra.mxu0 %v1111
      %1131 = vmatmul.f32.gmra.mxu0 %v1107
      %v1132 = vpop.f32.mrf.mxu0
      %v1133 = vadd.f32 %v992, %v1132
      %1134 = vmatmul.f32.gmra.mxu0 %v1109
      %v1135 = vpop.f32.mrf.mxu0
      %v1136 = vadd.f32 %v993, %v1135
      %1137 = vdwg.mxu0
      %vm1138 = vcmask 130048
      %v1139 = vsel %vm1138, %v1133, -inf
      %1140 = vmax.xlane.f32.xlu0 %v1139
      %v1141 = vpop.xlane.xlu0 %1140
      %v1142 = vsel %vm1138, %v1136, -inf
      %1143 = vmax.xlane.f32.xlu0 %v1142
      %v1144 = vpop.xlane.xlu0 %1143
      %v1145 = vsub.f32 %v1133, %v1141
      %v1146 = vsub.f32 %v1136, %v1144
      %v1147 = vmul.f32 %v1145, 1.442695
      %v1148 = vpow.pop %v1147
      %v1149 = vmul.f32 %v1146, 1.442695
      %v1150 = vpow.pop %v1149
      %v1151 = vsel %vm1138, %v1148, 0.0
      %1152 = vadd.xlane.f32.xlu0 %v1151
      %v1153 = vpop.xlane.xlu0 %1152
      %v1154 = vsel %vm1138, %v1150, 0.0
      %1155 = vadd.xlane.f32.xlu0 %v1154
      %v1156 = vpop.xlane.xlu0 %1155
      %v1157 = vrcp.pop %v1153
      %v1158 = vrcp.pop %v1156
      %v1159 = vmul.f32 %v1148, %v1157
      %v1160 = vmul.f32 %v1150, %v1158
      %1161 = vrot.lane.b32.xlu0 %v1098, 64
      %v1162 = vpop.permute.xlu0 %1161
      %1163 = vrot.lane.b32.xlu0 %v1099, 64
      %v1164 = vpop.permute.xlu0 %1163
      %v1168 = vsel %vm1138, %v1159, 0
      %v1171 = vsel %vm1138, %v1160, 0
      %1173 = vmatpush.msra.mxu0 0.0
      %1174 = vmatpush.msra.mxu0 0.0
      %1175 = vmatpush.msra.mxu0 0.0
      %1176 = vmatpush.msra.mxu0 0.0
      %1177 = vmatpush.msra.mxu0 0.0
      %1178 = vmatpush.msra.mxu0 0.0
      %1179 = vmatpush.msra.mxu0 0.0
      %1180 = vmatpush.msra.mxu0 0.0
      %1181 = vmatpush.msra.mxu0 0.0
      %1182 = vmatpush.msra.mxu0 0.0
      %1183 = vmatpush.msra.mxu0 0.0
      %1184 = vmatpush.msra.mxu0 0.0
      %1185 = vmatpush.msra.mxu0 0.0
      %1186 = vmatpush.msra.mxu0 0.0
      %1187 = vmatpush.msra.mxu0 %v1164
      %1188 = vmatpush.msra.mxu0 %v1162
      %1189 = vmatmul.f32.gmra.mxu0 %v1168
      %v1190 = vpop.f32.mrf.mxu0
      %v1191 = vadd.f32 0.0, %v1190
      %1192 = vmatmul.f32.gmra.mxu0 %v1171
      %v1193 = vpop.f32.mrf.mxu0
      %v1194 = vadd.f32 0.0, %v1193
      %1195 = vdwg.mxu0
      %1196 = vst.msk [vmem:[#allocation4] sm:$0xff] %vm1106, %v1191
      %1197 = vst.msk [vmem:[#allocation4 + $0x8] sm:$0xff] %vm1106, %v1194
      %v1198 = vld [vmem:[#allocation3] sm:$0xff]
      %v1199 = vld [vmem:[#allocation3 + $0x8] sm:$0xff]
      %1202 = vrot.lane.b32.xlu0 %v1198, 120
      %v1203 = vpop.permute.xlu0 %1202
      %1204 = vrot.lane.b32.xlu0 %v1199, 120
      %v1205 = vpop.permute.xlu0 %1204
      %1206 = vrot.lane.b32.xlu0 %v1198, 88
      %v1207 = vpop.permute.xlu0 %1206
      %1208 = vrot.lane.b32.xlu0 %v1199, 88
      %v1209 = vpop.permute.xlu0 %1208
      %v1210 = vsel %vm1106, %v1203, 0
      %v1212 = vsel %vm1106, %v1205, 0
      %v1214 = vsel %vm1106, %v1207, 0
      %v1216 = vsel %vm1106, %v1209, 0
      %1218 = vmatpush.xpose.msra.mxu0 0.0
      %1219 = vmatpush.xpose.msra.mxu0 0.0
      %1220 = vmatpush.xpose.msra.mxu0 0.0
      %1221 = vmatpush.xpose.msra.mxu0 0.0
      %1222 = vmatpush.xpose.msra.mxu0 0.0
      %1223 = vmatpush.xpose.msra.mxu0 0.0
      %1224 = vmatpush.xpose.msra.mxu0 0.0
      %1225 = vmatpush.xpose.msra.mxu0 0.0
      %1226 = vmatpush.xpose.msra.mxu0 0.0
      %1227 = vmatpush.xpose.msra.mxu0 0.0
      %1228 = vmatpush.xpose.msra.mxu0 0.0
      %1229 = vmatpush.xpose.msra.mxu0 0.0
      %1230 = vmatpush.xpose.msra.mxu0 0.0
      %1231 = vmatpush.xpose.msra.mxu0 0.0
      %1232 = vmatpush.xpose.msra.mxu0 %v1216
      %1233 = vmatpush.xpose.msra.mxu0 %v1214
      %1234 = vmatmul.f32.gmra.mxu0 %v1210
      %v1235 = vpop.f32.mrf.mxu0
      %v1236 = vadd.f32 %v992, %v1235
      %1237 = vmatmul.f32.gmra.mxu0 %v1212
      %v1238 = vpop.f32.mrf.mxu0
      %v1239 = vadd.f32 %v993, %v1238
      %1240 = vdwg.mxu0
      %v1241 = vsel %vm1138, %v1236, -inf
      %1242 = vmax.xlane.f32.xlu0 %v1241
      %v1243 = vpop.xlane.xlu0 %1242
      %v1244 = vsel %vm1138, %v1239, -inf
      %1245 = vmax.xlane.f32.xlu0 %v1244
      %v1246 = vpop.xlane.xlu0 %1245
      %v1247 = vsub.f32 %v1236, %v1243
      %v1248 = vsub.f32 %v1239, %v1246
      %v1249 = vmul.f32 %v1247, 1.442695
      %v1250 = vpow.pop %v1249
      %v1251 = vmul.f32 %v1248, 1.442695
      %v1252 = vpow.pop %v1251
      %v1253 = vsel %vm1138, %v1250, 0.0
      %1254 = vadd.xlane.f32.xlu0 %v1253
      %v1255 = vpop.xlane.xlu0 %1254
      %v1256 = vsel %vm1138, %v1252, 0.0
      %1257 = vadd.xlane.f32.xlu0 %v1256
      %v1258 = vpop.xlane.xlu0 %1257
      %v1259 = vrcp.pop %v1255
      %v1260 = vrcp.pop %v1258
      %v1261 = vmul.f32 %v1250, %v1259
      %v1262 = vmul.f32 %v1252, %v1260
      %1263 = vrot.lane.b32.xlu0 %v1198, 56
      %v1264 = vpop.permute.xlu0 %1263
      %1265 = vrot.lane.b32.xlu0 %v1199, 56
      %v1266 = vpop.permute.xlu0 %1265
      %v1270 = vsel %vm1138, %v1261, 0
      %v1273 = vsel %vm1138, %v1262, 0
      %1275 = vmatpush.msra.mxu0 0.0
      %1276 = vmatpush.msra.mxu0 0.0
      %1277 = vmatpush.msra.mxu0 0.0
      %1278 = vmatpush.msra.mxu0 0.0
      %1279 = vmatpush.msra.mxu0 0.0
      %1280 = vmatpush.msra.mxu0 0.0
      %1281 = vmatpush.msra.mxu0 0.0
      %1282 = vmatpush.msra.mxu0 0.0
      %1283 = vmatpush.msra.mxu0 0.0
      %1284 = vmatpush.msra.mxu0 0.0
      %1285 = vmatpush.msra.mxu0 0.0
      %1286 = vmatpush.msra.mxu0 0.0
      %1287 = vmatpush.msra.mxu0 0.0
      %1288 = vmatpush.msra.mxu0 0.0
      %1289 = vmatpush.msra.mxu0 %v1266
      %1290 = vmatpush.msra.mxu0 %v1264
      %1291 = vmatmul.f32.gmra.mxu0 %v1270
      %v1292 = vpop.f32.mrf.mxu0
      %v1293 = vadd.f32 0.0, %v1292
      %1294 = vmatmul.f32.gmra.mxu0 %v1273
      %v1295 = vpop.f32.mrf.mxu0
      %v1296 = vadd.f32 0.0, %v1295
      %1297 = vdwg.mxu0
      %1300 = vrot.lane.b32.xlu0 %v1293, 8
      %v1301 = vpop.permute.xlu0 %1300
      %1302 = vrot.lane.b32.xlu0 %v1296, 8
      %v1303 = vpop.permute.xlu0 %1302
      %vm1306 = vcmask 130112
      %1307 = vst.msk [vmem:[#allocation4] sm:$0xff] %vm1306, %v1301
      %1308 = vst.msk [vmem:[#allocation4 + $0x8] sm:$0xff] %vm1306, %v1303
      %v1309 = vld [vmem:[#allocation3] sm:$0xff]
      %v1310 = vld [vmem:[#allocation3 + $0x8] sm:$0xff]
      %1313 = vrot.lane.b32.xlu0 %v1309, 112
      %v1314 = vpop.permute.xlu0 %1313
      %1315 = vrot.lane.b32.xlu0 %v1310, 112
      %v1316 = vpop.permute.xlu0 %1315
      %1317 = vrot.lane.b32.xlu0 %v1309, 80
      %v1318 = vpop.permute.xlu0 %1317
      %1319 = vrot.lane.b32.xlu0 %v1310, 80
      %v1320 = vpop.permute.xlu0 %1319
      %v1321 = vsel %vm1106, %v1314, 0
      %v1323 = vsel %vm1106, %v1316, 0
      %v1325 = vsel %vm1106, %v1318, 0
      %v1327 = vsel %vm1106, %v1320, 0
      %1329 = vmatpush.xpose.msra.mxu0 0.0
      %1330 = vmatpush.xpose.msra.mxu0 0.0
      %1331 = vmatpush.xpose.msra.mxu0 0.0
      %1332 = vmatpush.xpose.msra.mxu0 0.0
      %1333 = vmatpush.xpose.msra.mxu0 0.0
      %1334 = vmatpush.xpose.msra.mxu0 0.0
      %1335 = vmatpush.xpose.msra.mxu0 0.0
      %1336 = vmatpush.xpose.msra.mxu0 0.0
      %1337 = vmatpush.xpose.msra.mxu0 0.0
      %1338 = vmatpush.xpose.msra.mxu0 0.0
      %1339 = vmatpush.xpose.msra.mxu0 0.0
      %1340 = vmatpush.xpose.msra.mxu0 0.0
      %1341 = vmatpush.xpose.msra.mxu0 0.0
      %1342 = vmatpush.xpose.msra.mxu0 0.0
      %1343 = vmatpush.xpose.msra.mxu0 %v1327
      %1344 = vmatpush.xpose.msra.mxu0 %v1325
      %1345 = vmatmul.f32.gmra.mxu0 %v1321
      %v1346 = vpop.f32.mrf.mxu0
      %v1347 = vadd.f32 %v992, %v1346
      %1348 = vmatmul.f32.gmra.mxu0 %v1323
      %v1349 = vpop.f32.mrf.mxu0
      %v1350 = vadd.f32 %v993, %v1349
      %1351 = vdwg.mxu0
      %v1352 = vsel %vm1138, %v1347, -inf
      %1353 = vmax.xlane.f32.xlu0 %v1352
      %v1354 = vpop.xlane.xlu0 %1353
      %v1355 = vsel %vm1138, %v1350, -inf
      %1356 = vmax.xlane.f32.xlu0 %v1355
      %v1357 = vpop.xlane.xlu0 %1356
      %v1358 = vsub.f32 %v1347, %v1354
      %v1359 = vsub.f32 %v1350, %v1357
      %v1360 = vmul.f32 %v1358, 1.442695
      %v1361 = vpow.pop %v1360
      %v1362 = vmul.f32 %v1359, 1.442695
      %v1363 = vpow.pop %v1362
      %v1364 = vsel %vm1138, %v1361, 0.0
      %1365 = vadd.xlane.f32.xlu0 %v1364
      %v1366 = vpop.xlane.xlu0 %1365
      %v1367 = vsel %vm1138, %v1363, 0.0
      %1368 = vadd.xlane.f32.xlu0 %v1367
      %v1369 = vpop.xlane.xlu0 %1368
      %v1370 = vrcp.pop %v1366
      %v1371 = vrcp.pop %v1369
      %v1372 = vmul.f32 %v1361, %v1370
      %v1373 = vmul.f32 %v1363, %v1371
      %1374 = vrot.lane.b32.xlu0 %v1309, 48
      %v1375 = vpop.permute.xlu0 %1374
      %1376 = vrot.lane.b32.xlu0 %v1310, 48
      %v1377 = vpop.permute.xlu0 %1376
      %v1381 = vsel %vm1138, %v1372, 0
      %v1384 = vsel %vm1138, %v1373, 0
      %1386 = vmatpush.msra.mxu0 0.0
      %1387 = vmatpush.msra.mxu0 0.0
      %1388 = vmatpush.msra.mxu0 0.0
      %1389 = vmatpush.msra.mxu0 0.0
      %1390 = vmatpush.msra.mxu0 0.0
      %1391 = vmatpush.msra.mxu0 0.0
      %1392 = vmatpush.msra.mxu0 0.0
      %1393 = vmatpush.msra.mxu0 0.0
      %1394 = vmatpush.msra.mxu0 0.0
      %1395 = vmatpush.msra.mxu0 0.0
      %1396 = vmatpush.msra.mxu0 0.0
      %1397 = vmatpush.msra.mxu0 0.0
      %1398 = vmatpush.msra.mxu0 0.0
      %1399 = vmatpush.msra.mxu0 0.0
      %1400 = vmatpush.msra.mxu0 %v1377
      %1401 = vmatpush.msra.mxu0 %v1375
      %1402 = vmatmul.f32.gmra.mxu0 %v1381
      %v1403 = vpop.f32.mrf.mxu0
      %v1404 = vadd.f32 0.0, %v1403
      %1405 = vmatmul.f32.gmra.mxu0 %v1384
      %v1406 = vpop.f32.mrf.mxu0
      %v1407 = vadd.f32 0.0, %v1406
      %1408 = vdwg.mxu0
      %1411 = vrot.lane.b32.xlu0 %v1404, 16
      %v1412 = vpop.permute.xlu0 %1411
      %1413 = vrot.lane.b32.xlu0 %v1407, 16
      %v1414 = vpop.permute.xlu0 %1413
      %vm1417 = vcmask 195712
      %1418 = vst.msk [vmem:[#allocation4] sm:$0xff] %vm1417, %v1412
      %1419 = vst.msk [vmem:[#allocation4 + $0x8] sm:$0xff] %vm1417, %v1414
      %v1420 = vld [vmem:[#allocation3] sm:$0xff]
      %v1421 = vld [vmem:[#allocation3 + $0x8] sm:$0xff]
      %1424 = vrot.lane.b32.xlu0 %v1420, 104
      %v1425 = vpop.permute.xlu0 %1424
      %1426 = vrot.lane.b32.xlu0 %v1421, 104
      %v1427 = vpop.permute.xlu0 %1426
      %1428 = vrot.lane.b32.xlu0 %v1420, 72
      %v1429 = vpop.permute.xlu0 %1428
      %1430 = vrot.lane.b32.xlu0 %v1421, 72
      %v1431 = vpop.permute.xlu0 %1430
      %v1432 = vsel %vm1106, %v1425, 0
      %v1434 = vsel %vm1106, %v1427, 0
      %v1436 = vsel %vm1106, %v1429, 0
      %v1438 = vsel %vm1106, %v1431, 0
      %1440 = vmatpush.xpose.msra.mxu0 0.0
      %1441 = vmatpush.xpose.msra.mxu0 0.0
      %1442 = vmatpush.xpose.msra.mxu0 0.0
      %1443 = vmatpush.xpose.msra.mxu0 0.0
      %1444 = vmatpush.xpose.msra.mxu0 0.0
      %1445 = vmatpush.xpose.msra.mxu0 0.0
      %1446 = vmatpush.xpose.msra.mxu0 0.0
      %1447 = vmatpush.xpose.msra.mxu0 0.0
      %1448 = vmatpush.xpose.msra.mxu0 0.0
      %1449 = vmatpush.xpose.msra.mxu0 0.0
      %1450 = vmatpush.xpose.msra.mxu0 0.0
      %1451 = vmatpush.xpose.msra.mxu0 0.0
      %1452 = vmatpush.xpose.msra.mxu0 0.0
      %1453 = vmatpush.xpose.msra.mxu0 0.0
      %1454 = vmatpush.xpose.msra.mxu0 %v1438
      %1455 = vmatpush.xpose.msra.mxu0 %v1436
      %1456 = vmatmul.f32.gmra.mxu0 %v1432
      %v1457 = vpop.f32.mrf.mxu0
      %v1458 = vadd.f32 %v992, %v1457
      %1459 = vmatmul.f32.gmra.mxu0 %v1434
      %v1460 = vpop.f32.mrf.mxu0
      %v1461 = vadd.f32 %v993, %v1460
      %1462 = vdwg.mxu0
      %v1463 = vsel %vm1138, %v1458, -inf
      %1464 = vmax.xlane.f32.xlu0 %v1463
      %v1465 = vpop.xlane.xlu0 %1464
      %v1466 = vsel %vm1138, %v1461, -inf
      %1467 = vmax.xlane.f32.xlu0 %v1466
      %v1468 = vpop.xlane.xlu0 %1467
      %v1469 = vsub.f32 %v1458, %v1465
      %v1470 = vsub.f32 %v1461, %v1468
      %v1471 = vmul.f32 %v1469, 1.442695
      %v1472 = vpow.pop %v1471
      %v1473 = vmul.f32 %v1470, 1.442695
      %v1474 = vpow.pop %v1473
      %v1475 = vsel %vm1138, %v1472, 0.0
      %1476 = vadd.xlane.f32.xlu0 %v1475
      %v1477 = vpop.xlane.xlu0 %1476
      %v1478 = vsel %vm1138, %v1474, 0.0
      %1479 = vadd.xlane.f32.xlu0 %v1478
      %v1480 = vpop.xlane.xlu0 %1479
      %v1481 = vrcp.pop %v1477
      %v1482 = vrcp.pop %v1480
      %v1483 = vmul.f32 %v1472, %v1481
      %v1484 = vmul.f32 %v1474, %v1482
      %1485 = vrot.lane.b32.xlu0 %v1420, 40
      %v1486 = vpop.permute.xlu0 %1485
      %1487 = vrot.lane.b32.xlu0 %v1421, 40
      %v1488 = vpop.permute.xlu0 %1487
      %v1492 = vsel %vm1138, %v1483, 0
      %v1495 = vsel %vm1138, %v1484, 0
      %1497 = vmatpush.msra.mxu0 0.0
      %1498 = vmatpush.msra.mxu0 0.0
      %1499 = vmatpush.msra.mxu0 0.0
      %1500 = vmatpush.msra.mxu0 0.0
      %1501 = vmatpush.msra.mxu0 0.0
      %1502 = vmatpush.msra.mxu0 0.0
      %1503 = vmatpush.msra.mxu0 0.0
      %1504 = vmatpush.msra.mxu0 0.0
      %1505 = vmatpush.msra.mxu0 0.0
      %1506 = vmatpush.msra.mxu0 0.0
      %1507 = vmatpush.msra.mxu0 0.0
      %1508 = vmatpush.msra.mxu0 0.0
      %1509 = vmatpush.msra.mxu0 0.0
      %1510 = vmatpush.msra.mxu0 0.0
      %1511 = vmatpush.msra.mxu0 %v1488
      %1512 = vmatpush.msra.mxu0 %v1486
      %1513 = vmatmul.f32.gmra.mxu0 %v1492
      %v1514 = vpop.f32.mrf.mxu0
      %v1515 = vadd.f32 0.0, %v1514
      %1516 = vmatmul.f32.gmra.mxu0 %v1495
      %v1517 = vpop.f32.mrf.mxu0
      %v1518 = vadd.f32 0.0, %v1517
      %1519 = vdwg.mxu0
      %1522 = vrot.lane.b32.xlu0 %v1515, 24
      %v1523 = vpop.permute.xlu0 %1522
      %1524 = vrot.lane.b32.xlu0 %v1518, 24
      %v1525 = vpop.permute.xlu0 %1524
      %vm1528 = vcmask 261312
      %1529 = vst.msk [vmem:[#allocation4] sm:$0xff] %vm1528, %v1523
      %1530 = vst.msk [vmem:[#allocation4 + $0x8] sm:$0xff] %vm1528, %v1525
      %v1531 = vld [vmem:[#allocation4] sm:$0xff]
      %v1532 = vld [vmem:[#allocation4 + $0x8] sm:$0xff]
      %v1533 = vld [vmem:[%s701] sm:$0xff]
      %v1534 = vld [vmem:[%s701 + $0x8] sm:$0xff]
      %v1535 = vld [vmem:[%s701 + $0x10] sm:$0xff]
      %v1536 = vld [vmem:[%s701 + $0x18] sm:$0xff]
      %v1537 = vld [vmem:[%s704] sm:$0x1]
      %v1539 = vperm.slane %v1537, 0
      %v1542 = vsel %vm996, %v1531, 0
      %v1545 = vsel %vm996, %v1532, 0
      %1547 = vmatpush.msra.mxu0 0.0
      %1548 = vmatpush.msra.mxu0 0.0
      %1549 = vmatpush.msra.mxu0 0.0
      %1550 = vmatpush.msra.mxu0 0.0
      %1551 = vmatpush.msra.mxu0 0.0
      %1552 = vmatpush.msra.mxu0 0.0
      %1553 = vmatpush.msra.mxu0 0.0
      %1554 = vmatpush.msra.mxu0 0.0
      %1555 = vmatpush.msra.mxu0 0.0
      %1556 = vmatpush.msra.mxu0 0.0
      %1557 = vmatpush.msra.mxu0 0.0
      %1558 = vmatpush.msra.mxu0 0.0
      %1559 = vmatpush.msra.mxu0 %v1536
      %1560 = vmatpush.msra.mxu0 %v1535
      %1561 = vmatpush.msra.mxu0 %v1534
      %1562 = vmatpush.msra.mxu0 %v1533
      %1563 = vmatmul.f32.gmra.mxu0 %v1542
      %v1564 = vpop.f32.mrf.mxu0
      %v1565 = vadd.f32 %v1539, %v1564
      %1566 = vmatmul.f32.gmra.mxu0 %v1545
      %v1567 = vpop.f32.mrf.mxu0
      %v1568 = vadd.f32 %v1539, %v1567
      %1569 = vdwg.mxu0
      %v1570 = vadd.f32 %v990, %v1565
      %v1571 = vadd.f32 %v991, %v1568
      %v1572 = vld [vmem:[%s713] sm:$0x1]
      %v1573 = vld [vmem:[%s716] sm:$0x1]
      %v1574 = vsel %vm996, %v1570, 0.0
      %1575 = vadd.xlane.f32.xlu0 %v1574
      %v1576 = vpop.xlane.xlu0 %1575
      %v1577 = vsel %vm996, %v1571, 0.0
      %1578 = vadd.xlane.f32.xlu0 %v1577
      %v1579 = vpop.xlane.xlu0 %1578
      %v1580 = vmul.f32 %v1576, %v1009
      %v1581 = vmul.f32 %v1579, %v1009
      %v1582 = vsub.f32 %v1570, %v1580
      %v1583 = vsub.f32 %v1571, %v1581
      %v1584 = vmul.f32 %v1582, %v1582
      %v1585 = vmul.f32 %v1583, %v1583
      %v1586 = vsel %vm996, %v1584, 0.0
      %1587 = vadd.xlane.f32.xlu0 %v1586
      %v1588 = vpop.xlane.xlu0 %1587
      %v1589 = vsel %vm996, %v1585, 0.0
      %1590 = vadd.xlane.f32.xlu0 %v1589
      %v1591 = vpop.xlane.xlu0 %1590
      %v1592 = vmul.f32 %v1588, %v1009
      %v1593 = vmul.f32 %v1591, %v1009
      %v1594 = vadd.f32 %v1592, 1e-12
      %v1595 = vadd.f32 %v1593, 1e-12
      %v1596 = vrsqrt.pop %v1594
      %v1597 = vmul.f32 %v1596, %v1594
      %v1598 = vmul.f32 %v1597, %v1596
      %v1599 = vmul.f32 0.5, %v1598
      %v1600 = vsub.f32 1.5, %v1599
      %v1601 = vmul.f32 %v1596, %v1600
      %vm1602 = vweird.f32 %v1594
      %vm1603 = vweird.f32 %v1596
      %vm1604 = vmor %vm1602, %vm1603
      %v1605 = vsel %vm1604, %v1596, %v1601
      %v1606 = vrsqrt.pop %v1595
      %v1607 = vmul.f32 %v1606, %v1595
      %v1608 = vmul.f32 %v1607, %v1606
      %v1609 = vmul.f32 0.5, %v1608
      %v1610 = vsub.f32 1.5, %v1609
      %v1611 = vmul.f32 %v1606, %v1610
      %vm1612 = vweird.f32 %v1595
      %vm1613 = vweird.f32 %v1606
      %vm1614 = vmor %vm1612, %vm1613
      %v1615 = vsel %vm1614, %v1606, %v1611
      %v1616 = vmul.f32 %v1582, %v1605
      %v1617 = vmul.f32 %v1583, %v1615
      %v1619 = vperm.slane %v1572, 0
      %v1621 = vmul.f32 %v1616, %v1619
      %v1622 = vmul.f32 %v1617, %v1619
      %v1624 = vperm.slane %v1573, 0
      %v1626 = vadd.f32 %v1621, %v1624
      %v1627 = vadd.f32 %v1622, %v1624
      %v1628 = vld [vmem:[%s721] sm:$0xff]
      %v1629 = vld [vmem:[%s721 + $0x8] sm:$0xff]
      %v1630 = vld [vmem:[%s721 + $0x10] sm:$0xff]
      %v1631 = vld [vmem:[%s721 + $0x18] sm:$0xff]
      %v1632 = vld [vmem:[%s724] sm:$0x1]
      %v1634 = vperm.slane %v1632, 0
      %v1637 = vsel %vm996, %v1626, 0
      %v1640 = vsel %vm996, %v1627, 0
      %1642 = vmatpush.msra.mxu0 0.0
      %1643 = vmatpush.msra.mxu0 0.0
      %1644 = vmatpush.msra.mxu0 0.0
      %1645 = vmatpush.msra.mxu0 0.0
      %1646 = vmatpush.msra.mxu0 0.0
      %1647 = vmatpush.msra.mxu0 0.0
      %1648 = vmatpush.msra.mxu0 0.0
      %1649 = vmatpush.msra.mxu0 0.0
      %1650 = vmatpush.msra.mxu0 0.0
      %1651 = vmatpush.msra.mxu0 0.0
      %1652 = vmatpush.msra.mxu0 0.0
      %1653 = vmatpush.msra.mxu0 0.0
      %1654 = vmatpush.msra.mxu0 %v1631
      %1655 = vmatpush.msra.mxu0 %v1630
      %1656 = vmatpush.msra.mxu0 %v1629
      %1657 = vmatpush.msra.mxu0 %v1628
      %1658 = vmatmul.f32.gmra.mxu0 %v1637
      %v1659 = vpop.f32.mrf.mxu0
      %v1660 = vadd.f32 %v1634, %v1659
      %1661 = vmatmul.f32.gmra.mxu0 %v1640
      %v1662 = vpop.f32.mrf.mxu0
      %v1663 = vadd.f32 %v1634, %v1662
      %1664 = vdwg.mxu0
      %v1665 = vmul.f32 %v1660, %v1660
      %v1666 = vmul.f32 %v1663, %v1663
      %v1667 = vmul.f32 %v1660, %v1665
      %v1668 = vmul.f32 %v1663, %v1666
      %v1669 = vmul.f32 %v1667, 0.044715
      %v1670 = vmul.f32 %v1668, 0.044715
      %v1671 = vadd.f32 %v1660, %v1669
      %v1672 = vadd.f32 %v1663, %v1670
      %v1673 = vmul.f32 %v1671, 0.7978846
      %v1674 = vmul.f32 %v1672, 0.7978846
      %v1675 = vtanh.pop %v1673
      %v1676 = vtanh.pop %v1674
      %v1677 = vadd.f32 %v1675, 1.0
      %v1678 = vadd.f32 %v1676, 1.0
      %v1679 = vmul.f32 %v1677, 0.5
      %v1680 = vmul.f32 %v1678, 0.5
      %v1681 = vmul.f32 %v1660, %v1679
      %v1682 = vmul.f32 %v1663, %v1680
      %v1683 = vld [vmem:[%s729] sm:$0xff]
      %v1684 = vld [vmem:[%s729 + $0x8] sm:$0xff]
      %v1685 = vld [vmem:[%s729 + $0x10] sm:$0xff]
      %v1686 = vld [vmem:[%s729 + $0x18] sm:$0xff]
      %v1687 = vld [vmem:[%s729 + $0x20] sm:$0xff]
      %v1688 = vld [vmem:[%s729 + $0x28] sm:$0xff]
      %v1689 = vld [vmem:[%s729 + $0x30] sm:$0xff]
      %v1690 = vld [vmem:[%s729 + $0x38] sm:$0xff]
      %v1691 = vld [vmem:[%s729 + $0x40] sm:$0xff]
      %v1692 = vld [vmem:[%s729 + $0x48] sm:$0xff]
      %v1693 = vld [vmem:[%s729 + $0x50] sm:$0xff]
      %v1694 = vld [vmem:[%s729 + $0x58] sm:$0xff]
      %v1695 = vld [vmem:[%s729 + $0x60] sm:$0xff]
      %v1696 = vld [vmem:[%s729 + $0x68] sm:$0xff]
      %v1697 = vld [vmem:[%s729 + $0x70] sm:$0xff]
      %v1698 = vld [vmem:[%s729 + $0x78] sm:$0xff]
      %1699 = vmatpush.msra.mxu0 %v1698
      %1700 = vmatpush.msra.mxu0 %v1697
      %1701 = vmatpush.msra.mxu0 %v1696
      %1702 = vmatpush.msra.mxu0 %v1695
      %1703 = vmatpush.msra.mxu0 %v1694
      %1704 = vmatpush.msra.mxu0 %v1693
      %1705 = vmatpush.msra.mxu0 %v1692
      %1706 = vmatpush.msra.mxu0 %v1691
      %1707 = vmatpush.msra.mxu0 %v1690
      %1708 = vmatpush.msra.mxu0 %v1689
      %1709 = vmatpush.msra.mxu0 %v1688
      %1710 = vmatpush.msra.mxu0 %v1687
      %1711 = vmatpush.msra.mxu0 %v1686
      %1712 = vmatpush.msra.mxu0 %v1685
      %1713 = vmatpush.msra.mxu0 %v1684
      %1714 = vmatpush.msra.mxu0 %v1683
      %1715 = vmatmul.f32.gmra.mxu0 %v1681
      %v1716 = vpop.f32.mrf.mxu0
      %v1717 = vadd.f32 0.0, %v1716
      %1718 = vmatmul.f32.gmra.mxu0 %v1682
      %v1719 = vpop.f32.mrf.mxu0
      %v1720 = vadd.f32 0.0, %v1719
      %1721 = vdwg.mxu0
      %v1722 = vadd.f32 %v1570, %v1717
      %v1723 = vadd.f32 %v1571, %v1720
      %v1724 = vld [vmem:[%s732] sm:$0x1]
      %v1726 = vperm.slane %v1724, 0
      %v1728 = vadd.f32 %v1722, %v1726
      %v1729 = vadd.f32 %v1723, %v1726
      %1730 = vst.msk [vmem:[#allocation2] sm:$0xff] %vm996, %v1728
      %1731 = vst.msk [vmem:[#allocation2 + $0x8] sm:$0xff] %vm996, %v1729
      %p1732 = scmp.eq.s32.totalorder %s29, 1
      // Predicated region
      $region97: #{vit_encoder_forward.1} parent=91 // pred_check
        %p1733 = pneg %p1732
      $region98: #{vit_encoder_forward.1} parent=91 // pred_check_branch
        %1735 = sbr.rel (%p1733) target = $region100
      $region99: #{vit_encoder_forward.1} parent=91 // pred_region
        %v1736 = vld [vmem:[%s16] sm:$0x1]
        %v1737 = vld [vmem:[%s17] sm:$0x1]
        %v1738 = vsel %vm996, %v1728, 0.0
        %1739 = vadd.xlane.f32.xlu0 %v1738
        %v1740 = vpop.xlane.xlu0 %1739
        %v1741 = vsel %vm996, %v1729, 0.0
        %1742 = vadd.xlane.f32.xlu0 %v1741
        %v1743 = vpop.xlane.xlu0 %1742
        %v1744 = vmul.f32 %v1740, %v1009
        %v1745 = vmul.f32 %v1743, %v1009
        %v1746 = vsub.f32 %v1728, %v1744
        %v1747 = vsub.f32 %v1729, %v1745
        %v1748 = vmul.f32 %v1746, %v1746
        %v1749 = vmul.f32 %v1747, %v1747
        %v1750 = vsel %vm996, %v1748, 0.0
        %1751 = vadd.xlane.f32.xlu0 %v1750
        %v1752 = vpop.xlane.xlu0 %1751
        %v1753 = vsel %vm996, %v1749, 0.0
        %1754 = vadd.xlane.f32.xlu0 %v1753
        %v1755 = vpop.xlane.xlu0 %1754
        %v1756 = vmul.f32 %v1752, %v1009
        %v1757 = vmul.f32 %v1755, %v1009
        %v1758 = vadd.f32 %v1756, 1e-12
        %v1759 = vadd.f32 %v1757, 1e-12
        %v1760 = vrsqrt.pop %v1758
        %v1761 = vmul.f32 %v1760, %v1758
        %v1762 = vmul.f32 %v1761, %v1760
        %v1763 = vmul.f32 0.5, %v1762
        %v1764 = vsub.f32 1.5, %v1763
        %v1765 = vmul.f32 %v1760, %v1764
        %vm1766 = vweird.f32 %v1758
        %vm1767 = vweird.f32 %v1760
        %vm1768 = vmor %vm1766, %vm1767
        %v1769 = vsel %vm1768, %v1760, %v1765
        %v1770 = vrsqrt.pop %v1759
        %v1771 = vmul.f32 %v1770, %v1759
        %v1772 = vmul.f32 %v1771, %v1770
        %v1773 = vmul.f32 0.5, %v1772
        %v1774 = vsub.f32 1.5, %v1773
        %v1775 = vmul.f32 %v1770, %v1774
        %vm1776 = vweird.f32 %v1759
        %vm1777 = vweird.f32 %v1770
        %vm1778 = vmor %vm1776, %vm1777
        %v1779 = vsel %vm1778, %v1770, %v1775
        %v1780 = vmul.f32 %v1746, %v1769
        %v1781 = vmul.f32 %v1747, %v1779
        %v1783 = vperm.slane %v1736, 0
        %v1785 = vmul.f32 %v1780, %v1783
        %v1786 = vmul.f32 %v1781, %v1783
        %v1788 = vperm.slane %v1737, 0
        %v1790 = vadd.f32 %v1785, %v1788
        %v1791 = vadd.f32 %v1786, %v1788
        %1792 = vst.msk [vmem:[%s18] sm:$0xff] %vm996, %v1790
        %1793 = vst.msk [vmem:[%s18 + $0x8] sm:$0xff] %vm996, %v1791
      $region100: #{vit_encoder_forward.1} parent=91 // pred_fallthru
        _
      // Predicated region
      $region101: #{vit_encoder_forward.1} parent=91 // pred_check
        %p1794 = pneg %p480
      $region102: #{vit_encoder_forward.1} parent=91 // pred_check_branch
        %1796 = sbr.rel (%p1794) target = $region104
      $region103: #{vit_encoder_forward.1} parent=91 // pred_region
        _
      $region104: #{vit_encoder_forward.1} parent=91 // pred_fallthru
        _
      // Predicated region
      $region105: #{vit_encoder_forward.1} parent=91 // pred_check
        %p1797 = pneg %p480
      $region106: #{vit_encoder_forward.1} parent=91 // pred_check_branch
        %1799 = sbr.rel (%p1797) target = $region108
      $region107: #{vit_encoder_forward.1} parent=91 // pred_region
        _
      $region108: #{vit_encoder_forward.1} parent=91 // pred_fallthru
        _
    $region92: #{vit_encoder_forward.1} parent=5 // pred_fallthru
      _
    %p1800 = scmp.le.s32.totalorder 2, %s24
    // Predicated region
    $region109: #{vit_encoder_forward.1} parent=5 // pred_check
      %p1801 = pneg %p1800
    $region110: #{vit_encoder_forward.1} parent=5 // pred_check_branch
      %1803 = sbr.rel (%p1801) target = $region112
    $region111: #{vit_encoder_forward.1} parent=5 // pred_region
      %s1804 = ssub.s32 %s24, 2
    $region112: #{vit_encoder_forward.1} parent=5 // pred_fallthru
      _
  $region6: #{vit_encoder_forward.1} parent=0 // loop_footer
    %s28 = sadd.s32 1, %s24
  $region7: #{vit_encoder_forward.1} parent=0 // loop_footer_branch
    %23 = sbr.rel target = $region3
  $region8: #{vit_encoder_forward.1} parent=0 // loop_exit
    _

</llo_original>
